<compile_context>
chip_gen: v7x
topology: tpu7x:2x2x1
jax: 0.10.0
libtpu: 0.0.40
codegen_flags: <defaults>
</compile_context>

<pallas_src>
import jax
import jax.numpy as jnp
import numpy as np
from jax.experimental import pallas as pl
from jax.experimental.pallas import tpu as pltpu


# ---------------------------------------------------------------------------
# Fused kernel: TIME_POOL  ->  [Linear(+folded BN) -> ReLU] x3  ->  Linear
# ---------------------------------------------------------------------------
def _fused_kernel(x_ref,
                  w1_ref, b1_ref,
                  w2_ref, b2_ref,
                  w3_ref, b3_ref,
                  w4_ref, b4_ref,
                  out_ref, idx_ref):
    x = x_ref[...]                                   # (B, T, V, C) f32
    B, T, V, C = x.shape

    # -- TIME_POOL: max over T of the features --------------------------------
    xmax = jnp.max(x, axis=1)                        # (B, V, C)
    h = xmax.reshape(B * V, C)                       # (B*V, C)

    # -- argmax over T of the per-(b,t,v) channel mean (return_indices path) --
    mean_c = jnp.mean(x, axis=3)                     # (B, T, V) f32
    m = jnp.max(mean_c, axis=1, keepdims=True)       # (B, 1, V)
    iota_t = jax.lax.broadcasted_iota(jnp.int32, mean_c.shape, 1)
    masked = jnp.where(mean_c >= m, iota_t, T)       # first-max index
    idx_ref[...] = jnp.min(masked, axis=1)           # (B, V) int32
    # TODO(synk): PyTorch max_pool2d return_indices is int64; int32 emitted here.

    # -- MLP (Dropout layers are identity in eval mode; BN folded into w/b) ---
    def lin_relu(h, w_ref, b_ref):
        y = jnp.dot(h.astype(w_ref.dtype), w_ref[...],
                    preferred_element_type=jnp.float32) + b_ref[...]
        return jnp.maximum(y, 0.0)

    h = lin_relu(h, w1_ref, b1_ref)                  # change_layer
    h = lin_relu(h, w2_ref, b2_ref)                  # fc_layer block 0
    h = lin_relu(h, w3_ref, b3_ref)                  # fc_layer block 1
    out_ref[...] = (jnp.dot(h.astype(w4_ref.dtype), w4_ref[...],
                            preferred_element_type=jnp.float32)
                    + b4_ref[...])                   # video_emb, f32 out


def transformation_forward(x, params, t5_channel):
    B, T, V, C = x.shape
    flat = [x,
            params["w1"], params["b1"],
            params["w2"], params["b2"],
            params["w3"], params["b3"],
            params["w4"], params["b4"]]

    def full_spec(a):
        nd = a.ndim
        return pl.BlockSpec(a.shape, lambda i, _nd=nd: (0,) * _nd)

    out2d, idx = pl.pallas_call(
        _fused_kernel,
        out_shape=(jax.ShapeDtypeStruct((B * V, t5_channel), jnp.float32),
                   jax.ShapeDtypeStruct((B, V), jnp.int32)),
        grid=(1,),
        in_specs=[full_spec(a) for a in flat],
        out_specs=(pl.BlockSpec((B * V, t5_channel), lambda i: (0, 0)),
                   pl.BlockSpec((B, V), lambda i: (0, 0))),
        compiler_params=pltpu.CompilerParams(
            dimension_semantics=("arbitrary",)),
    )(*flat)

    return out2d.reshape(B, V, t5_channel), idx.reshape(B, V, 1, 1)


# ---------------------------------------------------------------------------
# Parameter construction (deterministic, synthetic). BatchNorm(eval) is folded
# into the preceding Linear; folded weights are stored in bf16, biases in f32.
# ---------------------------------------------------------------------------
def make_params(key, in_channel, t5_channel, hidden=512, eps=1e-5):
    keys = jax.random.split(key, 20)

    def linear(kw, kb, fin, fout):
        bound = 1.0 / np.sqrt(fin)
        w = jax.random.uniform(kw, (fin, fout), jnp.float32, -bound, bound)
        b = jax.random.uniform(kb, (1, fout), jnp.float32, -bound, bound)
        return w, b

    def bn(kg, kb, km, kv, feat):
        gamma = 1.0 + 0.1 * jax.random.normal(kg, (1, feat), jnp.float32)
        beta = 0.1 * jax.random.normal(kb, (1, feat), jnp.float32)
        mean = 0.1 * jax.random.normal(km, (1, feat), jnp.float32)
        var = 1.0 + 0.1 * jnp.abs(jax.random.normal(kv, (1, feat), jnp.float32))
        scale = gamma / jnp.sqrt(var + eps)
        shift = beta - mean * scale
        return scale, shift

    def fold(w, b, s, t):
        # (h @ w + b) * s + t  ==  h @ (w * s) + (b * s + t)
        return (w * s).astype(jnp.bfloat16), (b * s + t)

    p = {}
    w1, b1 = linear(keys[0], keys[1], in_channel, hidden)
    s1, t1 = bn(keys[2], keys[3], keys[4], keys[5], hidden)
    p["w1"], p["b1"] = fold(w1, b1, s1, t1)

    w2, b2 = linear(keys[6], keys[7], hidden, hidden)
    s2, t2 = bn(keys[8], keys[9], keys[10], keys[11], hidden)
    p["w2"], p["b2"] = fold(w2, b2, s2, t2)

    w3, b3 = linear(keys[12], keys[13], hidden, hidden)
    s3, t3 = bn(keys[14], keys[15], keys[16], keys[17], hidden)
    p["w3"], p["b3"] = fold(w3, b3, s3, t3)

    w4, b4 = linear(keys[18], keys[19], hidden, t5_channel)
    p["w4"], p["b4"] = w4.astype(jnp.bfloat16), b4
    return p


# ---------------------------------------------------------------------------
# Pure-JAX reference for verification (same folded params, f32 activations)
# ---------------------------------------------------------------------------
def reference_forward(x, params, t5_channel):
    B, T, V, C = x.shape
    xp = jnp.transpose(x, (0, 2, 1, 3))                       # (B, V, T, C)
    x_ = jnp.mean(xp, axis=3)                                 # avg_pool2d over C
    max_indices = jnp.argmax(x_, axis=2).astype(jnp.int32).reshape(B, V, 1, 1)
    pooled = jnp.max(xp, axis=2)                              # (B, V, C)
    h = pooled.reshape(-1, C)

    def lbr(h, w, b):
        return jnp.maximum(h @ w.astype(jnp.float32) + b, 0.0)

    h = lbr(h, params["w1"], params["b1"])
    h = lbr(h, params["w2"], params["b2"])
    h = lbr(h, params["w3"], params["b3"])
    out = h @ params["w4"].astype(jnp.float32) + params["b4"]
    return out.reshape(B, -1, t5_channel), max_indices


if __name__ == "__main__":
    B, T, V, C = 2, 8, 4, 32          # batch, time, joints, feature channel
    T5_CHANNEL = 128

    key = jax.random.PRNGKey(0)
    kx, kp = jax.random.split(key)
    x = jax.random.normal(kx, (B, T, V, C), jnp.float32)
    params = make_params(kp, in_channel=C, t5_channel=T5_CHANNEL)

    out, idx = transformation_forward(x, params, T5_CHANNEL)
    out, idx = jax.block_until_ready((out, idx))

    ref_out, ref_idx = reference_forward(x, params, T5_CHANNEL)
    # Kernel runs bf16 activations x bf16 weights with f32 accumulation;
    # reference keeps f32 activations -> loosened tolerance.
    np.testing.assert_allclose(np.asarray(out), np.asarray(ref_out),
                               rtol=2e-2, atol=2e-2)
    np.testing.assert_array_equal(np.asarray(idx), np.asarray(ref_idx))

    assert out.shape == (B, V, T5_CHANNEL)
    assert idx.shape == (B, V, 1, 1)
    print("KERNEL_OK")
</pallas_src>

<mosaic_0001>
module attributes {stable_mosaic.version = 11 : i64} {
  func.func @_fused_kernel(%arg0: i32, %arg1: memref<2x8x4x32xf32, #tpu.memory_space<vmem>>, %arg2: memref<32x512xbf16, #tpu.memory_space<vmem>>, %arg3: memref<1x512xf32, #tpu.memory_space<vmem>>, %arg4: memref<512x512xbf16, #tpu.memory_space<vmem>>, %arg5: memref<1x512xf32, #tpu.memory_space<vmem>>, %arg6: memref<512x512xbf16, #tpu.memory_space<vmem>>, %arg7: memref<1x512xf32, #tpu.memory_space<vmem>>, %arg8: memref<512x128xbf16, #tpu.memory_space<vmem>>, %arg9: memref<1x128xf32, #tpu.memory_space<vmem>>, %arg10: memref<8x128xf32, #tpu.memory_space<vmem>>, %arg11: memref<2x4xi32, #tpu.memory_space<vmem>>) attributes {dimension_semantics = [#tpu.dimension_semantics<arbitrary>], iteration_bounds = array<i64: 1>, scalar_prefetch = 0 : i64, scratch_operands = 0 : i64, tpu.core_type = #tpu.core_type<tc>, window_params = [{pipeline_mode = #tpu.pipeline_mode<synchronous>, transform_indices = @transform_0, window_bounds = array<i64: 2, 8, 4, 32>}, {pipeline_mode = #tpu.pipeline_mode<synchronous>, transform_indices = @transform_1, window_bounds = array<i64: 32, 512>}, {pipeline_mode = #tpu.pipeline_mode<synchronous>, transform_indices = @transform_2, window_bounds = array<i64: 1, 512>}, {pipeline_mode = #tpu.pipeline_mode<synchronous>, transform_indices = @transform_3, window_bounds = array<i64: 512, 512>}, {pipeline_mode = #tpu.pipeline_mode<synchronous>, transform_indices = @transform_4, window_bounds = array<i64: 1, 512>}, {pipeline_mode = #tpu.pipeline_mode<synchronous>, transform_indices = @transform_5, window_bounds = array<i64: 512, 512>}, {pipeline_mode = #tpu.pipeline_mode<synchronous>, transform_indices = @transform_6, window_bounds = array<i64: 1, 512>}, {pipeline_mode = #tpu.pipeline_mode<synchronous>, transform_indices = @transform_7, window_bounds = array<i64: 512, 128>}, {pipeline_mode = #tpu.pipeline_mode<synchronous>, transform_indices = @transform_8, window_bounds = array<i64: 1, 128>}, {pipeline_mode = #tpu.pipeline_mode<synchronous>, transform_indices = @transform_9, window_bounds = array<i64: 8, 128>}, {pipeline_mode = #tpu.pipeline_mode<synchronous>, transform_indices = @transform_10, window_bounds = array<i64: 2, 4>}]} {
    %c0 = arith.constant 0 : index
    %c0_0 = arith.constant 0 : index
    %c0_1 = arith.constant 0 : index
    %c0_2 = arith.constant 0 : index
    %0 = vector.load %arg1[%c0, %c0_0, %c0_1, %c0_2] : memref<2x8x4x32xf32, #tpu.memory_space<vmem>>, vector<2x8x4x32xf32>
    %cst = arith.constant dense<0xFF800000> : vector<2x4x32xf32>
    %1 = vector.multi_reduction <maximumf>, %0, %cst [1] : vector<2x8x4x32xf32> to vector<2x4x32xf32>
    %2 = vector.shape_cast %1 : vector<2x4x32xf32> to vector<8x32xf32>
    %cst_3 = arith.constant dense<0.000000e+00> : vector<2x8x4xf32>
    %3 = vector.multi_reduction <add>, %0, %cst_3 [3] : vector<2x8x4x32xf32> to vector<2x8x4xf32>
    %cst_4 = arith.constant 3.200000e+01 : f32
    %4 = vector.broadcast %cst_4 : f32 to vector<2x8x4xf32>
    %5 = arith.divf %3, %4 : vector<2x8x4xf32>
    %cst_5 = arith.constant dense<0xFF800000> : vector<2x4xf32>
    %6 = vector.multi_reduction <maximumf>, %5, %cst_5 [1] : vector<2x8x4xf32> to vector<2x4xf32>
    %7 = vector.shape_cast %6 : vector<2x4xf32> to vector<2x1x4xf32>
    %8 = tpu.iota {dimensions = array<i32: 1>} : vector<2x8x4xi32>
    %9 = vector.broadcast %7 : vector<2x1x4xf32> to vector<2x8x4xf32>
    %10 = arith.cmpf oge, %5, %9 : vector<2x8x4xf32>
    %c8_i32 = arith.constant 8 : i32
    %11 = vector.broadcast %c8_i32 : i32 to vector<2x8x4xi32>
    %12 = arith.select %10, %8, %11 : vector<2x8x4xi1>, vector<2x8x4xi32>
    %cst_6 = arith.constant dense<2147483647> : vector<2x4xi32>
    %13 = vector.multi_reduction <minsi>, %12, %cst_6 [1] : vector<2x8x4xi32> to vector<2x4xi32>
    %c0_7 = arith.constant 0 : index
    %c0_8 = arith.constant 0 : index
    %14 = vector.load %arg11[%c0_7, %c0_8] : memref<2x4xi32, #tpu.memory_space<vmem>>, vector<2x4xi32>
    tpu.vector_store %arg11[%c0_7, %c0_8], %13 {strides = array<i32>} : memref<2x4xi32, #tpu.memory_space<vmem>>, vector<2x4xi32>,
    %15 = arith.truncf %2 : vector<8x32xf32> to vector<8x32xbf16>
    %c0_9 = arith.constant 0 : index
    %c0_10 = arith.constant 0 : index
    %16 = vector.load %arg2[%c0_9, %c0_10] : memref<32x512xbf16, #tpu.memory_space<vmem>>, vector<32x512xbf16>
    %cst_11 = arith.constant dense<0.000000e+00> : vector<8x512xf32>
    %17 = tpu.matmul %15, %16, %cst_11 {dimension_numbers = #tpu.dot_dimension_numbers<[1], [0], [0], [1], [0, 0, 1, 1], [], []>} : vector<8x32xbf16>, vector<32x512xbf16>, vector<8x512xf32> -> vector<8x512xf32>
    %c0_12 = arith.constant 0 : index
    %c0_13 = arith.constant 0 : index
    %18 = vector.load %arg3[%c0_12, %c0_13] : memref<1x512xf32, #tpu.memory_space<vmem>>, vector<1x512xf32>
    %19 = vector.broadcast %18 : vector<1x512xf32> to vector<8x512xf32>
    %20 = arith.addf %17, %19 : vector<8x512xf32>
    %cst_14 = arith.constant 0.000000e+00 : f32
    %21 = vector.broadcast %cst_14 : f32 to vector<8x512xf32>
    %22 = arith.maximumf %20, %21 : vector<8x512xf32>
    %23 = arith.truncf %22 : vector<8x512xf32> to vector<8x512xbf16>
    %c0_15 = arith.constant 0 : index
    %c0_16 = arith.constant 0 : index
    %24 = vector.load %arg4[%c0_15, %c0_16] : memref<512x512xbf16, #tpu.memory_space<vmem>>, vector<512x512xbf16>
    %cst_17 = arith.constant dense<0.000000e+00> : vector<8x512xf32>
    %25 = tpu.matmul %23, %24, %cst_17 {dimension_numbers = #tpu.dot_dimension_numbers<[1], [0], [0], [1], [0, 0, 1, 1], [], []>} : vector<8x512xbf16>, vector<512x512xbf16>, vector<8x512xf32> -> vector<8x512xf32>
    %c0_18 = arith.constant 0 : index
    %c0_19 = arith.constant 0 : index
    %26 = vector.load %arg5[%c0_18, %c0_19] : memref<1x512xf32, #tpu.memory_space<vmem>>, vector<1x512xf32>
    %27 = vector.broadcast %26 : vector<1x512xf32> to vector<8x512xf32>
    %28 = arith.addf %25, %27 : vector<8x512xf32>
    %cst_20 = arith.constant 0.000000e+00 : f32
    %29 = vector.broadcast %cst_20 : f32 to vector<8x512xf32>
    %30 = arith.maximumf %28, %29 : vector<8x512xf32>
    %31 = arith.truncf %30 : vector<8x512xf32> to vector<8x512xbf16>
    %c0_21 = arith.constant 0 : index
    %c0_22 = arith.constant 0 : index
    %32 = vector.load %arg6[%c0_21, %c0_22] : memref<512x512xbf16, #tpu.memory_space<vmem>>, vector<512x512xbf16>
    %cst_23 = arith.constant dense<0.000000e+00> : vector<8x512xf32>
    %33 = tpu.matmul %31, %32, %cst_23 {dimension_numbers = #tpu.dot_dimension_numbers<[1], [0], [0], [1], [0, 0, 1, 1], [], []>} : vector<8x512xbf16>, vector<512x512xbf16>, vector<8x512xf32> -> vector<8x512xf32>
    %c0_24 = arith.constant 0 : index
    %c0_25 = arith.constant 0 : index
    %34 = vector.load %arg7[%c0_24, %c0_25] : memref<1x512xf32, #tpu.memory_space<vmem>>, vector<1x512xf32>
    %35 = vector.broadcast %34 : vector<1x512xf32> to vector<8x512xf32>
    %36 = arith.addf %33, %35 : vector<8x512xf32>
    %cst_26 = arith.constant 0.000000e+00 : f32
    %37 = vector.broadcast %cst_26 : f32 to vector<8x512xf32>
    %38 = arith.maximumf %36, %37 : vector<8x512xf32>
    %39 = arith.truncf %38 : vector<8x512xf32> to vector<8x512xbf16>
    %c0_27 = arith.constant 0 : index
    %c0_28 = arith.constant 0 : index
    %40 = vector.load %arg8[%c0_27, %c0_28] : memref<512x128xbf16, #tpu.memory_space<vmem>>, vector<512x128xbf16>
    %cst_29 = arith.constant dense<0.000000e+00> : vector<8x128xf32>
    %41 = tpu.matmul %39, %40, %cst_29 {dimension_numbers = #tpu.dot_dimension_numbers<[1], [0], [0], [1], [0, 0, 1, 1], [], []>} : vector<8x512xbf16>, vector<512x128xbf16>, vector<8x128xf32> -> vector<8x128xf32>
    %c0_30 = arith.constant 0 : index
    %c0_31 = arith.constant 0 : index
    %42 = vector.load %arg9[%c0_30, %c0_31] : memref<1x128xf32, #tpu.memory_space<vmem>>, vector<1x128xf32>
    %43 = vector.broadcast %42 : vector<1x128xf32> to vector<8x128xf32>
    %44 = arith.addf %41, %43 : vector<8x128xf32>
    %c0_32 = arith.constant 0 : index
    %c0_33 = arith.constant 0 : index
    %45 = vector.load %arg10[%c0_32, %c0_33] : memref<8x128xf32, #tpu.memory_space<vmem>>, vector<8x128xf32>
    tpu.vector_store %arg10[%c0_32, %c0_33], %44 {strides = array<i32>} : memref<8x128xf32, #tpu.memory_space<vmem>>, vector<8x128xf32>,
    return
  }
  func.func @transform_0(%arg0: i32) -> (i32, i32, i32, i32) {
    %c0_i32 = arith.constant 0 : i32
    %c0_i32_0 = arith.constant 0 : i32
    %c0_i32_1 = arith.constant 0 : i32
    %c0_i32_2 = arith.constant 0 : i32
    %c0_i32_3 = arith.constant 0 : i32
    return %c0_i32, %c0_i32_0, %c0_i32_1, %c0_i32_2 : i32, i32, i32, i32
  }
  func.func @transform_1(%arg0: i32) -> (i32, i32) {
    %c0_i32 = arith.constant 0 : i32
    %c0_i32_0 = arith.constant 0 : i32
    %c0_i32_1 = arith.constant 0 : i32
    return %c0_i32, %c0_i32_0 : i32, i32
  }
  func.func @transform_2(%arg0: i32) -> (i32, i32) {
    %c0_i32 = arith.constant 0 : i32
    %c0_i32_0 = arith.constant 0 : i32
    %c0_i32_1 = arith.constant 0 : i32
    return %c0_i32, %c0_i32_0 : i32, i32
  }
  func.func @transform_3(%arg0: i32) -> (i32, i32) {
    %c0_i32 = arith.constant 0 : i32
    %c0_i32_0 = arith.constant 0 : i32
    %c0_i32_1 = arith.constant 0 : i32
    return %c0_i32, %c0_i32_0 : i32, i32
  }
  func.func @transform_4(%arg0: i32) -> (i32, i32) {
    %c0_i32 = arith.constant 0 : i32
    %c0_i32_0 = arith.constant 0 : i32
    %c0_i32_1 = arith.constant 0 : i32
    return %c0_i32, %c0_i32_0 : i32, i32
  }
  func.func @transform_5(%arg0: i32) -> (i32, i32) {
    %c0_i32 = arith.constant 0 : i32
    %c0_i32_0 = arith.constant 0 : i32
    %c0_i32_1 = arith.constant 0 : i32
    return %c0_i32, %c0_i32_0 : i32, i32
  }
  func.func @transform_6(%arg0: i32) -> (i32, i32) {
    %c0_i32 = arith.constant 0 : i32
    %c0_i32_0 = arith.constant 0 : i32
    %c0_i32_1 = arith.constant 0 : i32
    return %c0_i32, %c0_i32_0 : i32, i32
  }
  func.func @transform_7(%arg0: i32) -> (i32, i32) {
    %c0_i32 = arith.constant 0 : i32
    %c0_i32_0 = arith.constant 0 : i32
    %c0_i32_1 = arith.constant 0 : i32
    return %c0_i32, %c0_i32_0 : i32, i32
  }
  func.func @transform_8(%arg0: i32) -> (i32, i32) {
    %c0_i32 = arith.constant 0 : i32
    %c0_i32_0 = arith.constant 0 : i32
    %c0_i32_1 = arith.constant 0 : i32
    return %c0_i32, %c0_i32_0 : i32, i32
  }
  func.func @transform_9(%arg0: i32) -> (i32, i32) {
    %c0_i32 = arith.constant 0 : i32
    %c0_i32_0 = arith.constant 0 : i32
    %c0_i32_1 = arith.constant 0 : i32
    return %c0_i32, %c0_i32_0 : i32, i32
  }
  func.func @transform_10(%arg0: i32) -> (i32, i32) {
    %c0_i32 = arith.constant 0 : i32
    %c0_i32_0 = arith.constant 0 : i32
    %c0_i32_1 = arith.constant 0 : i32
    return %c0_i32, %c0_i32_0 : i32, i32
  }
}

</mosaic_0001>

<llo_original>
// kernel: tpu_custom_call.1
$region0: #{tpu_custom_call.1}
  #allocation0 [shape = 'u32[]', space=smem, size = 0x4, offset = 0x4, fixed_abs, tag = 'smem constant byte address 0x4 - core index']
  #allocation1 [shape = 'u32[144,128]{1,0:T(1,128)}', space=vmem, size = 0x12000, scoped, tag = 'internal scratch']
  %s0 = inlined_call_operand.hbm [shape: f32[2,8,4,32], index: 0, kind: input, shape index: {}]
  %s1 = inlined_call_operand.hbm [shape: bf16[32,512], index: 1, kind: input, shape index: {}]
  %s2 = inlined_call_operand.vmem [shape: f32[1,512], index: 2, kind: input, shape index: {}]
  %s3 = inlined_call_operand.hbm [shape: bf16[512,512], index: 3, kind: input, shape index: {}]
  %s4 = inlined_call_operand.vmem [shape: f32[1,512], index: 4, kind: input, shape index: {}]
  %s5 = inlined_call_operand.hbm [shape: bf16[512,512], index: 5, kind: input, shape index: {}]
  %s6 = inlined_call_operand.vmem [shape: f32[1,512], index: 6, kind: input, shape index: {}]
  %s7 = inlined_call_operand.hbm [shape: bf16[512,128], index: 7, kind: input, shape index: {}]
  %s8 = inlined_call_operand.vmem [shape: f32[1,128], index: 8, kind: input, shape index: {}]
  %s9 = inlined_call_operand.hbm [shape: f32[8,128], index: 9, kind: output, shape index: {0}]
  %s10 = inlined_call_operand.hbm [shape: s32[2,4], index: 10, kind: output, shape index: {1}]
  %11 = xla_tuple %s9, %s10
  %s12 = sld [smem:[#allocation0]]
  $region74: #{tpu_custom_call.1} parent=0
    _
  %s14 = ssub.s32 1, %s12
  %s15 = scalar_select 0, %s14, %s12
  $region1: #{tpu_custom_call.1} parent=0
    #allocation2 [shape = 'u8[32768]{0}', space=vmem, size = 0x8000, scoped, tag = 'input window, operand 0, single buffered']
    #allocation3 [shape = 's32[1]{0}', space=sflag, size = 0x4, scoped, tag = 'scoped memory for tpu_custom_call.1']
    #allocation4 [shape = 's32[1]{0}', space=sflag, size = 0x4, scoped, tag = 'scoped memory for tpu_custom_call.1']
    #allocation5 [shape = 'u8[32768]{0}', space=vmem, size = 0x8000, scoped, tag = 'input window, operand 1, single buffered']
    #allocation6 [shape = 's32[1]{0}', space=sflag, size = 0x4, scoped, tag = 'scoped memory for tpu_custom_call.1']
    #allocation7 [shape = 'u8[524288]{0}', space=vmem, size = 0x80000, scoped, tag = 'input window, operand 3, single buffered']
    #allocation8 [shape = 'u8[524288]{0}', space=vmem, size = 0x80000, scoped, tag = 'input window, operand 5, single buffered']
    #allocation9 [shape = 's32[1]{0}', space=sflag, size = 0x4, scoped, tag = 'scoped memory for tpu_custom_call.1']
    #allocation10 [shape = 'u8[131072]{0}', space=vmem, size = 0x20000, scoped, tag = 'input window, operand 7, single buffered']
    #allocation11 [shape = 'u8[4096]{0}', space=vmem, size = 0x1000, scoped, tag = 'output window, operand 0, single buffered']
    #allocation12 [shape = 'u8[1024]{0}', space=vmem, size = 0x400, scoped, tag = 'output window, operand 1, single buffered']
    #allocation13 [shape = 's32[1]{0}', space=sflag, size = 0x4, scoped, tag = 'scoped memory for tpu_custom_call.1']
    %16 = vsyncpa [#allocation3], 0
    %17 = vsyncpa [#allocation6], 0
    %18 = vsyncpa [#allocation9], 0
    %19 = vsyncpa [#allocation4], 0
    %20 = vsyncpa [#allocation13], 0
    // Predicated region
    $region2: #{tpu_custom_call.1} parent=1 // pred_check
      _
    $region3: #{tpu_custom_call.1} parent=1 // pred_check_branch
      %22 = sbr.rel (0) target = $region5
    $region4: #{tpu_custom_call.1} parent=1 // pred_region
      %s24 = ssub.s32 1024, 1024
      %25 = vsyncadd [#allocation3], %s24
      %s26 = sshll.u32 [#allocation2], 4
      %s27 = int_to_ptr.vmem [resolvable:$true] %s26
      %32 = dma.hbm_to_vmem [thread:$0]  %s0, 1024, %s27, [#allocation3], 64, 64, 4
    $region5: #{tpu_custom_call.1} parent=1 // pred_fallthru
      _
    // Predicated region
    $region6: #{tpu_custom_call.1} parent=1 // pred_check
      _
    $region7: #{tpu_custom_call.1} parent=1 // pred_check_branch
      %34 = sbr.rel (0) target = $region9
    $region8: #{tpu_custom_call.1} parent=1 // pred_region
      %s36 = ssub.s32 1024, 1024
      %37 = vsyncadd [#allocation6], %s36
      %s38 = sshll.u32 [#allocation5], 4
      %s39 = int_to_ptr.vmem [resolvable:$true] %s38
      %44 = dma.hbm_to_vmem [thread:$0]  %s1, 1024, %s39, [#allocation6], 256, 256, 16
    $region9: #{tpu_custom_call.1} parent=1 // pred_fallthru
      _
    // Predicated region
    $region10: #{tpu_custom_call.1} parent=1 // pred_check
      _
    $region11: #{tpu_custom_call.1} parent=1 // pred_check_branch
      %46 = sbr.rel (0) target = $region13
    $region12: #{tpu_custom_call.1} parent=1 // pred_region
      _
    $region13: #{tpu_custom_call.1} parent=1 // pred_fallthru
      _
    // Predicated region
    $region14: #{tpu_custom_call.1} parent=1 // pred_check
      _
    $region15: #{tpu_custom_call.1} parent=1 // pred_check_branch
      %48 = sbr.rel (0) target = $region17
    $region16: #{tpu_custom_call.1} parent=1 // pred_region
      %s50 = ssub.s32 16384, 16384
      %51 = vsyncadd [#allocation6], %s50
      %s52 = sshll.u32 [#allocation7], 4
      %s53 = int_to_ptr.vmem [resolvable:$true] %s52
      %58 = dma.hbm_to_vmem [thread:$0]  %s3, 16384, %s53, [#allocation6], 256, 256, 16
    $region17: #{tpu_custom_call.1} parent=1 // pred_fallthru
      _
    // Predicated region
    $region18: #{tpu_custom_call.1} parent=1 // pred_check
      _
    $region19: #{tpu_custom_call.1} parent=1 // pred_check_branch
      %60 = sbr.rel (0) target = $region21
    $region20: #{tpu_custom_call.1} parent=1 // pred_region
      _
    $region21: #{tpu_custom_call.1} parent=1 // pred_fallthru
      _
    // Predicated region
    $region22: #{tpu_custom_call.1} parent=1 // pred_check
      _
    $region23: #{tpu_custom_call.1} parent=1 // pred_check_branch
      %62 = sbr.rel (0) target = $region25
    $region24: #{tpu_custom_call.1} parent=1 // pred_region
      %s64 = ssub.s32 16384, 16384
      %65 = vsyncadd [#allocation9], %s64
      %s66 = sshll.u32 [#allocation8], 4
      %s67 = int_to_ptr.vmem [resolvable:$true] %s66
      %72 = dma.hbm_to_vmem [thread:$0]  %s5, 16384, %s67, [#allocation9], 256, 256, 16
    $region25: #{tpu_custom_call.1} parent=1 // pred_fallthru
      _
    // Predicated region
    $region26: #{tpu_custom_call.1} parent=1 // pred_check
      _
    $region27: #{tpu_custom_call.1} parent=1 // pred_check_branch
      %74 = sbr.rel (0) target = $region29
    $region28: #{tpu_custom_call.1} parent=1 // pred_region
      _
    $region29: #{tpu_custom_call.1} parent=1 // pred_fallthru
      _
    // Predicated region
    $region30: #{tpu_custom_call.1} parent=1 // pred_check
      _
    $region31: #{tpu_custom_call.1} parent=1 // pred_check_branch
      %76 = sbr.rel (0) target = $region33
    $region32: #{tpu_custom_call.1} parent=1 // pred_region
      %s78 = ssub.s32 4096, 4096
      %79 = vsyncadd [#allocation9], %s78
      %s80 = sshll.u32 [#allocation10], 4
      %s81 = int_to_ptr.vmem [resolvable:$true] %s80
      %86 = dma.hbm_to_vmem [thread:$0]  %s7, 4096, %s81, [#allocation9], 64, 64, 4
    $region33: #{tpu_custom_call.1} parent=1 // pred_fallthru
      _
    // Predicated region
    $region34: #{tpu_custom_call.1} parent=1 // pred_check
      _
    $region35: #{tpu_custom_call.1} parent=1 // pred_check_branch
      %88 = sbr.rel (0) target = $region37
    $region36: #{tpu_custom_call.1} parent=1 // pred_region
      _
    $region37: #{tpu_custom_call.1} parent=1 // pred_fallthru
      _
    // Predicated region
    $region38: #{tpu_custom_call.1} parent=1 // pred_check
      _
    $region39: #{tpu_custom_call.1} parent=1 // pred_check_branch
      %90 = sbr.rel (0) target = $region41
    $region40: #{tpu_custom_call.1} parent=1 // pred_region
      %91 = dma.done [#allocation3], 1024
    $region41: #{tpu_custom_call.1} parent=1 // pred_fallthru
      _
    // Predicated region
    $region42: #{tpu_custom_call.1} parent=1 // pred_check
      _
    $region43: #{tpu_custom_call.1} parent=1 // pred_check_branch
      %93 = sbr.rel (0) target = $region45
    $region44: #{tpu_custom_call.1} parent=1 // pred_region
      %94 = dma.done [#allocation6], 1024
    $region45: #{tpu_custom_call.1} parent=1 // pred_fallthru
      _
    // Predicated region
    $region46: #{tpu_custom_call.1} parent=1 // pred_check
      _
    $region47: #{tpu_custom_call.1} parent=1 // pred_check_branch
      %96 = sbr.rel (0) target = $region49
    $region48: #{tpu_custom_call.1} parent=1 // pred_region
      %97 = dma.done [#allocation6], 16384
    $region49: #{tpu_custom_call.1} parent=1 // pred_fallthru
      _
    // Predicated region
    $region50: #{tpu_custom_call.1} parent=1 // pred_check
      _
    $region51: #{tpu_custom_call.1} parent=1 // pred_check_branch
      %99 = sbr.rel (0) target = $region53
    $region52: #{tpu_custom_call.1} parent=1 // pred_region
      %100 = dma.done [#allocation9], 16384
    $region53: #{tpu_custom_call.1} parent=1 // pred_fallthru
      _
    // Predicated region
    $region54: #{tpu_custom_call.1} parent=1 // pred_check
      _
    $region55: #{tpu_custom_call.1} parent=1 // pred_check_branch
      %102 = sbr.rel (0) target = $region57
    $region56: #{tpu_custom_call.1} parent=1 // pred_region
      %103 = dma.done [#allocation9], 4096
    $region57: #{tpu_custom_call.1} parent=1 // pred_fallthru
      _
    %v105 = vld [vmem:[#allocation2] sm:$0xf]
    %v106 = vld [vmem:[#allocation2 + $0x4] sm:$0xf]
    %v107 = vld [vmem:[#allocation2 + $0x8] sm:$0xf]
    %v108 = vld [vmem:[#allocation2 + $0xc] sm:$0xf]
    %v109 = vld [vmem:[#allocation2 + $0x10] sm:$0xf]
    %v110 = vld [vmem:[#allocation2 + $0x14] sm:$0xf]
    %v111 = vld [vmem:[#allocation2 + $0x18] sm:$0xf]
    %v112 = vld [vmem:[#allocation2 + $0x1c] sm:$0xf]
    %v113 = vld [vmem:[#allocation2 + $0x20] sm:$0xf]
    %v114 = vld [vmem:[#allocation2 + $0x24] sm:$0xf]
    %v115 = vld [vmem:[#allocation2 + $0x28] sm:$0xf]
    %v116 = vld [vmem:[#allocation2 + $0x2c] sm:$0xf]
    %v117 = vld [vmem:[#allocation2 + $0x30] sm:$0xf]
    %v118 = vld [vmem:[#allocation2 + $0x34] sm:$0xf]
    %v119 = vld [vmem:[#allocation2 + $0x38] sm:$0xf]
    %v120 = vld [vmem:[#allocation2 + $0x3c] sm:$0xf]
    %vm121 = vcmask 257024
    %v122 = vsel %vm121, %v105, -inf
    %v123 = vsel %vm121, %v106, -inf
    %v124 = vsel %vm121, %v107, -inf
    %v125 = vmax.f32 %v122, %v124
    %v126 = vsel %vm121, %v108, -inf
    %v127 = vmax.f32 %v123, %v126
    %v128 = vsel %vm121, %v109, -inf
    %v129 = vmax.f32 %v125, %v128
    %v130 = vsel %vm121, %v110, -inf
    %v131 = vmax.f32 %v127, %v130
    %v132 = vsel %vm121, %v111, -inf
    %v133 = vmax.f32 %v129, %v132
    %v134 = vsel %vm121, %v112, -inf
    %v135 = vmax.f32 %v131, %v134
    %v136 = vmax.f32 %v133, %v135
    %v137 = vsel %vm121, %v113, -inf
    %v138 = vsel %vm121, %v114, -inf
    %v139 = vsel %vm121, %v115, -inf
    %v140 = vmax.f32 %v137, %v139
    %v141 = vsel %vm121, %v116, -inf
    %v142 = vmax.f32 %v138, %v141
    %v143 = vsel %vm121, %v117, -inf
    %v144 = vmax.f32 %v140, %v143
    %v145 = vsel %vm121, %v118, -inf
    %v146 = vmax.f32 %v142, %v145
    %v147 = vsel %vm121, %v119, -inf
    %v148 = vmax.f32 %v144, %v147
    %v149 = vsel %vm121, %v120, -inf
    %v150 = vmax.f32 %v146, %v149
    %v151 = vmax.f32 %v148, %v150
    %v152 = vsel %vm121, %v105, 0.0
    %153 = vadd.xlane.f32.xlu0 %v152
    %v154 = vpop.xlane.xlu0 %153
    %v155 = vsel %vm121, %v106, 0.0
    %156 = vadd.xlane.f32.xlu0 %v155
    %v157 = vpop.xlane.xlu0 %156
    %v158 = vsel %vm121, %v107, 0.0
    %159 = vadd.xlane.f32.xlu0 %v158
    %v160 = vpop.xlane.xlu0 %159
    %v161 = vsel %vm121, %v108, 0.0
    %162 = vadd.xlane.f32.xlu0 %v161
    %v163 = vpop.xlane.xlu0 %162
    %v164 = vsel %vm121, %v109, 0.0
    %165 = vadd.xlane.f32.xlu0 %v164
    %v166 = vpop.xlane.xlu0 %165
    %v167 = vsel %vm121, %v110, 0.0
    %168 = vadd.xlane.f32.xlu0 %v167
    %v169 = vpop.xlane.xlu0 %168
    %v170 = vsel %vm121, %v111, 0.0
    %171 = vadd.xlane.f32.xlu0 %v170
    %v172 = vpop.xlane.xlu0 %171
    %v173 = vsel %vm121, %v112, 0.0
    %174 = vadd.xlane.f32.xlu0 %v173
    %v175 = vpop.xlane.xlu0 %174
    %v176 = vsel %vm121, %v113, 0.0
    %177 = vadd.xlane.f32.xlu0 %v176
    %v178 = vpop.xlane.xlu0 %177
    %v179 = vsel %vm121, %v114, 0.0
    %180 = vadd.xlane.f32.xlu0 %v179
    %v181 = vpop.xlane.xlu0 %180
    %v182 = vsel %vm121, %v115, 0.0
    %183 = vadd.xlane.f32.xlu0 %v182
    %v184 = vpop.xlane.xlu0 %183
    %v185 = vsel %vm121, %v116, 0.0
    %186 = vadd.xlane.f32.xlu0 %v185
    %v187 = vpop.xlane.xlu0 %186
    %v188 = vsel %vm121, %v117, 0.0
    %189 = vadd.xlane.f32.xlu0 %v188
    %v190 = vpop.xlane.xlu0 %189
    %v191 = vsel %vm121, %v118, 0.0
    %192 = vadd.xlane.f32.xlu0 %v191
    %v193 = vpop.xlane.xlu0 %192
    %v194 = vsel %vm121, %v119, 0.0
    %195 = vadd.xlane.f32.xlu0 %v194
    %v196 = vpop.xlane.xlu0 %195
    %v197 = vsel %vm121, %v120, 0.0
    %198 = vadd.xlane.f32.xlu0 %v197
    %v199 = vpop.xlane.xlu0 %198
    %v200 = vrcp.pop 32.0
    %v201 = vmul.f32 %v154, %v200
    %v202 = vmul.f32 %v157, %v200
    %v203 = vmul.f32 %v160, %v200
    %v204 = vmul.f32 %v163, %v200
    %v205 = vmul.f32 %v166, %v200
    %v206 = vmul.f32 %v169, %v200
    %v207 = vmul.f32 %v172, %v200
    %v208 = vmul.f32 %v175, %v200
    %v209 = vmul.f32 %v178, %v200
    %v210 = vmul.f32 %v181, %v200
    %v211 = vmul.f32 %v184, %v200
    %v212 = vmul.f32 %v187, %v200
    %v213 = vmul.f32 %v190, %v200
    %v214 = vmul.f32 %v193, %v200
    %v215 = vmul.f32 %v196, %v200
    %v216 = vmul.f32 %v199, %v200
    %vm217 = vcmask 1043456
    %v218 = vsel %vm217, %v201, -inf
    %v219 = vsel %vm217, %v202, -inf
    %v220 = vsel %vm217, %v203, -inf
    %v221 = vmax.f32 %v218, %v220
    %v222 = vsel %vm217, %v204, -inf
    %v223 = vmax.f32 %v219, %v222
    %v224 = vsel %vm217, %v205, -inf
    %v225 = vmax.f32 %v221, %v224
    %v226 = vsel %vm217, %v206, -inf
    %v227 = vmax.f32 %v223, %v226
    %v228 = vsel %vm217, %v207, -inf
    %v229 = vmax.f32 %v225, %v228
    %v230 = vsel %vm217, %v208, -inf
    %v231 = vmax.f32 %v227, %v230
    %v232 = vmax.f32 %v229, %v231
    %v233 = vsel %vm217, %v209, -inf
    %v234 = vsel %vm217, %v210, -inf
    %v235 = vsel %vm217, %v211, -inf
    %v236 = vmax.f32 %v233, %v235
    %v237 = vsel %vm217, %v212, -inf
    %v238 = vmax.f32 %v234, %v237
    %v239 = vsel %vm217, %v213, -inf
    %v240 = vmax.f32 %v236, %v239
    %v241 = vsel %vm217, %v214, -inf
    %v242 = vmax.f32 %v238, %v241
    %v243 = vsel %vm217, %v215, -inf
    %v244 = vmax.f32 %v240, %v243
    %v245 = vsel %vm217, %v216, -inf
    %v246 = vmax.f32 %v242, %v245
    %v247 = vmax.f32 %v244, %v246
    %v248 = vlaneseq
    %v249 = vshrl.u32 %v248, 7
    %vm250 = vcmp.ge.f32.partialorder %v201, %v232
    %vm251 = vcmp.ge.f32.partialorder %v202, %v232
    %vm252 = vcmp.ge.f32.partialorder %v203, %v232
    %vm253 = vcmp.ge.f32.partialorder %v204, %v232
    %vm254 = vcmp.ge.f32.partialorder %v205, %v232
    %vm255 = vcmp.ge.f32.partialorder %v206, %v232
    %vm256 = vcmp.ge.f32.partialorder %v207, %v232
    %vm257 = vcmp.ge.f32.partialorder %v208, %v232
    %vm258 = vcmp.ge.f32.partialorder %v209, %v247
    %vm259 = vcmp.ge.f32.partialorder %v210, %v247
    %vm260 = vcmp.ge.f32.partialorder %v211, %v247
    %vm261 = vcmp.ge.f32.partialorder %v212, %v247
    %vm262 = vcmp.ge.f32.partialorder %v213, %v247
    %vm263 = vcmp.ge.f32.partialorder %v214, %v247
    %vm264 = vcmp.ge.f32.partialorder %v215, %v247
    %vm265 = vcmp.ge.f32.partialorder %v216, %v247
    %v266 = vlaneseq
    %v267 = vshrl.u32 %v266, 7
    %v268 = vsub.s32 0, %v267
    %v269 = vrot.slane %v249, %v268
    %v270 = vlaneseq
    %v271 = vshrl.u32 %v270, 7
    %v272 = vsub.s32 1, %v271
    %v273 = vrot.slane %v249, %v272
    %v274 = vlaneseq
    %v275 = vshrl.u32 %v274, 7
    %v276 = vsub.s32 2, %v275
    %v277 = vrot.slane %v249, %v276
    %v278 = vlaneseq
    %v279 = vshrl.u32 %v278, 7
    %v280 = vsub.s32 3, %v279
    %v281 = vrot.slane %v249, %v280
    %v282 = vlaneseq
    %v283 = vshrl.u32 %v282, 7
    %v284 = vsub.s32 4, %v283
    %v285 = vrot.slane %v249, %v284
    %v286 = vlaneseq
    %v287 = vshrl.u32 %v286, 7
    %v288 = vsub.s32 5, %v287
    %v289 = vrot.slane %v249, %v288
    %v290 = vlaneseq
    %v291 = vshrl.u32 %v290, 7
    %v292 = vsub.s32 6, %v291
    %v293 = vrot.slane %v249, %v292
    %v294 = vlaneseq
    %v295 = vshrl.u32 %v294, 7
    %v296 = vsub.s32 7, %v295
    %v297 = vrot.slane %v249, %v296
    %v298 = vsel %vm250, %v269, 8
    %v299 = vsel %vm251, %v273, 8
    %v300 = vsel %vm252, %v277, 8
    %v301 = vsel %vm253, %v281, 8
    %v302 = vsel %vm254, %v285, 8
    %v303 = vsel %vm255, %v289, 8
    %v304 = vsel %vm256, %v293, 8
    %v305 = vsel %vm257, %v297, 8
    %v306 = vsel %vm258, %v269, 8
    %v307 = vsel %vm259, %v273, 8
    %v308 = vsel %vm260, %v277, 8
    %v309 = vsel %vm261, %v281, 8
    %v310 = vsel %vm262, %v285, 8
    %v311 = vsel %vm263, %v289, 8
    %v312 = vsel %vm264, %v293, 8
    %v313 = vsel %vm265, %v297, 8
    %vm314 = vcmask 3072
    %v315 = vsel %vm314, %v298, 2147483647
    %v316 = vsel %vm314, %v299, 2147483647
    %v317 = vsel %vm314, %v300, 2147483647
    %vm318 = vcmp.lt.s32.totalorder %v315, %v317
    %v319 = vsel %vm318, %v315, %v317
    %v320 = vsel %vm314, %v301, 2147483647
    %vm321 = vcmp.lt.s32.totalorder %v316, %v320
    %v322 = vsel %vm321, %v316, %v320
    %v323 = vsel %vm314, %v302, 2147483647
    %vm324 = vcmp.lt.s32.totalorder %v319, %v323
    %v325 = vsel %vm324, %v319, %v323
    %v326 = vsel %vm314, %v303, 2147483647
    %vm327 = vcmp.lt.s32.totalorder %v322, %v326
    %v328 = vsel %vm327, %v322, %v326
    %v329 = vsel %vm314, %v304, 2147483647
    %vm330 = vcmp.lt.s32.totalorder %v325, %v329
    %v331 = vsel %vm330, %v325, %v329
    %v332 = vsel %vm314, %v305, 2147483647
    %vm333 = vcmp.lt.s32.totalorder %v328, %v332
    %v334 = vsel %vm333, %v328, %v332
    %vm335 = vcmp.lt.s32.totalorder %v331, %v334
    %v336 = vsel %vm335, %v331, %v334
    %v337 = vsel %vm314, %v306, 2147483647
    %v338 = vsel %vm314, %v307, 2147483647
    %v339 = vsel %vm314, %v308, 2147483647
    %vm340 = vcmp.lt.s32.totalorder %v337, %v339
    %v341 = vsel %vm340, %v337, %v339
    %v342 = vsel %vm314, %v309, 2147483647
    %vm343 = vcmp.lt.s32.totalorder %v338, %v342
    %v344 = vsel %vm343, %v338, %v342
    %v345 = vsel %vm314, %v310, 2147483647
    %vm346 = vcmp.lt.s32.totalorder %v341, %v345
    %v347 = vsel %vm346, %v341, %v345
    %v348 = vsel %vm314, %v311, 2147483647
    %vm349 = vcmp.lt.s32.totalorder %v344, %v348
    %v350 = vsel %vm349, %v344, %v348
    %v351 = vsel %vm314, %v312, 2147483647
    %vm352 = vcmp.lt.s32.totalorder %v347, %v351
    %v353 = vsel %vm352, %v347, %v351
    %v354 = vsel %vm314, %v313, 2147483647
    %vm355 = vcmp.lt.s32.totalorder %v350, %v354
    %v356 = vsel %vm355, %v350, %v354
    %vm357 = vcmp.lt.s32.totalorder %v353, %v356
    %v358 = vsel %vm357, %v353, %v356
    %359 = vset.pattern.permute.xlu0 0
    %360 = vperm.xlu0 %359, %v336
    %v361 = vpop.permute.xlu0 %360
    %362 = vset.pattern.permute.xlu0 0
    %363 = vperm.xlu0 %362, %v358
    %v364 = vpop.permute.xlu0 %363
    %v365 = vlaneseq
    %v366 = vand.u32 %v365, 127
    %v367 = vlaneseq
    %v368 = vshrl.u32 %v367, 7
    %v369 = vsub.s32 %v366, %v368
    %v370 = vrot.slane %v361, %v369
    %v371 = vlaneseq
    %v372 = vshrl.u32 %v371, 7
    %v373 = vsub.s32 %v366, %v372
    %v374 = vrot.slane %v364, %v373
    %vm375 = vcmask 1041409
    %v376 = vsel %vm375, %v374, %v370
    %vm377 = vcmask 25600
    %378 = vst.msk [vmem:[#allocation12] sm:$0x3] %vm377, %v376
    %v381 = vcombine.low %v136, %v151
    %v383 = vpack.c.bf16 %v381, %v381
    %v384 = vld [vmem:[#allocation5] sm:$0xff]
    %v385 = vld [vmem:[#allocation5 + $0x8] sm:$0xff]
    %v386 = vld [vmem:[#allocation5 + $0x10] sm:$0xff]
    %v387 = vld [vmem:[#allocation5 + $0x18] sm:$0xff]
    %v388 = vld [vmem:[#allocation5 + $0x20] sm:$0xff]
    %v389 = vld [vmem:[#allocation5 + $0x28] sm:$0xff]
    %v390 = vld [vmem:[#allocation5 + $0x30] sm:$0xff]
    %v391 = vld [vmem:[#allocation5 + $0x38] sm:$0xff]
    %v392 = vld [vmem:[%s2] sm:$0xf]
    %v394 = vlaneseq
    %v395 = vshrl.u32 %v394, 7
    %v396 = vsub.s32 0, %v395
    %v397 = vrot.slane %v392, %v396
    %v398 = vlaneseq
    %v399 = vshrl.u32 %v398, 7
    %v400 = vsub.s32 1, %v399
    %v401 = vrot.slane %v392, %v400
    %v402 = vlaneseq
    %v403 = vshrl.u32 %v402, 7
    %v404 = vsub.s32 2, %v403
    %v405 = vrot.slane %v392, %v404
    %v406 = vlaneseq
    %v407 = vshrl.u32 %v406, 7
    %v408 = vsub.s32 3, %v407
    %v409 = vrot.slane %v392, %v408
    %v422 = vunpack.c.l.b16 %v384
    %v423 = vunpack.c.h.b16 %v384
    %v424 = vunpack.c.l.b16 %v385
    %v425 = vunpack.c.h.b16 %v385
    %v426 = vunpack.c.l.b16 %v386
    %v427 = vunpack.c.h.b16 %v386
    %v428 = vunpack.c.l.b16 %v387
    %v429 = vunpack.c.h.b16 %v387
    %v430 = vunpack.c.l.b16 %v388
    %v431 = vunpack.c.h.b16 %v388
    %v432 = vunpack.c.l.b16 %v389
    %v433 = vunpack.c.h.b16 %v389
    %v434 = vunpack.c.l.b16 %v390
    %v435 = vunpack.c.h.b16 %v390
    %v436 = vunpack.c.l.b16 %v391
    %v437 = vunpack.c.h.b16 %v391
    %v438 = vpack.c.b16 %v426, %v422
    %v439 = vpack.c.b16 %v427, %v423
    %v440 = vpack.c.b16 %v428, %v424
    %v441 = vpack.c.b16 %v429, %v425
    %v442 = vpack.c.b16 %v434, %v430
    %v443 = vpack.c.b16 %v435, %v431
    %v444 = vpack.c.b16 %v436, %v432
    %v445 = vpack.c.b16 %v437, %v433
    %vm454 = vcmask 261120
    %v456 = vsel %vm454, %v383, 0
    %458 = vmatprep.subr.bf16.mxu0 %v439
    %459 = vmatpush1.bf16.msra.mxu0 %v438
    %460 = vmatprep.subr.bf16.mxu0 %v443
    %461 = vmatpush1.bf16.msra.mxu0 %v442
    %462 = vmatprep.subr.bf16.mxu0 0
    %463 = vmatpush1.bf16.msra.mxu0 0
    %464 = vmatprep.subr.bf16.mxu0 0
    %465 = vmatpush1.bf16.msra.mxu0 0
    %466 = vmatprep.subr.bf16.mxu0 0
    %467 = vmatpush1.bf16.msra.mxu0 0
    %468 = vmatprep.subr.bf16.mxu0 0
    %469 = vmatpush1.bf16.msra.mxu0 0
    %470 = vmatprep.subr.bf16.mxu0 0
    %471 = vmatpush1.bf16.msra.mxu0 0
    %472 = vmatprep.subr.bf16.mxu0 0
    %473 = vmatpush1.bf16.msra.mxu0 0
    %474 = vmatprep.subr.bf16.mxu0 0
    %475 = vmatpush1.bf16.msra.mxu0 0
    %476 = vmatprep.subr.bf16.mxu0 0
    %477 = vmatpush1.bf16.msra.mxu0 0
    %478 = vmatprep.subr.bf16.mxu0 0
    %479 = vmatpush1.bf16.msra.mxu0 0
    %480 = vmatprep.subr.bf16.mxu0 0
    %481 = vmatpush1.bf16.msra.mxu0 0
    %482 = vmatprep.subr.bf16.mxu0 0
    %483 = vmatpush1.bf16.msra.mxu0 0
    %484 = vmatprep.subr.bf16.mxu0 0
    %485 = vmatpush1.bf16.msra.mxu0 0
    %486 = vmatprep.subr.bf16.mxu0 0
    %487 = vmatpush1.bf16.msra.mxu0 0
    %488 = vmatprep.subr.bf16.mxu0 0
    %489 = vmatpush1.bf16.msra.mxu0 0
    %490 = vmatprep.mubr.bf16.mxu0 0
    %491 = vmatmul.mubr.bf16.gmra.mrb[0].mxu0 %v456
    %v492 = vpop.f32.mrb[0].mxu0
    %v493 = vadd.f32 %v397, %v492
    %v494 = vpop.f32.mrb[0].mxu0
    %v495 = vadd.f32 %v401, %v494
    %v496 = vpop.f32.mrb[0].mxu0
    %v497 = vpop.f32.mrb[0].mxu0
    %498 = vdwg.mxu0
    %499 = vmatprep.subr.bf16.mxu0 %v441
    %500 = vmatpush1.bf16.msra.mxu0 %v440
    %501 = vmatprep.subr.bf16.mxu0 %v445
    %502 = vmatpush1.bf16.msra.mxu0 %v444
    %503 = vmatprep.subr.bf16.mxu0 0
    %504 = vmatpush1.bf16.msra.mxu0 0
    %505 = vmatprep.subr.bf16.mxu0 0
    %506 = vmatpush1.bf16.msra.mxu0 0
    %507 = vmatprep.subr.bf16.mxu0 0
    %508 = vmatpush1.bf16.msra.mxu0 0
    %509 = vmatprep.subr.bf16.mxu0 0
    %510 = vmatpush1.bf16.msra.mxu0 0
    %511 = vmatprep.subr.bf16.mxu0 0
    %512 = vmatpush1.bf16.msra.mxu0 0
    %513 = vmatprep.subr.bf16.mxu0 0
    %514 = vmatpush1.bf16.msra.mxu0 0
    %515 = vmatprep.subr.bf16.mxu0 0
    %516 = vmatpush1.bf16.msra.mxu0 0
    %517 = vmatprep.subr.bf16.mxu0 0
    %518 = vmatpush1.bf16.msra.mxu0 0
    %519 = vmatprep.subr.bf16.mxu0 0
    %520 = vmatpush1.bf16.msra.mxu0 0
    %521 = vmatprep.subr.bf16.mxu0 0
    %522 = vmatpush1.bf16.msra.mxu0 0
    %523 = vmatprep.subr.bf16.mxu0 0
    %524 = vmatpush1.bf16.msra.mxu0 0
    %525 = vmatprep.subr.bf16.mxu0 0
    %526 = vmatpush1.bf16.msra.mxu0 0
    %527 = vmatprep.subr.bf16.mxu0 0
    %528 = vmatpush1.bf16.msra.mxu0 0
    %529 = vmatprep.subr.bf16.mxu0 0
    %530 = vmatpush1.bf16.msra.mxu0 0
    %531 = vmatprep.mubr.bf16.mxu0 0
    %532 = vmatmul.mubr.bf16.gmra.mrb[0].mxu0 %v456
    %v533 = vpop.f32.mrb[0].mxu0
    %v534 = vadd.f32 %v405, %v533
    %v535 = vpop.f32.mrb[0].mxu0
    %v536 = vadd.f32 %v409, %v535
    %v537 = vpop.f32.mrb[0].mxu0
    %v538 = vpop.f32.mrb[0].mxu0
    %539 = vdwg.mxu0
    %v540 = vmax.f32 %v493, 0.0
    %v541 = vmax.f32 %v495, 0.0
    %v542 = vmax.f32 %v534, 0.0
    %v543 = vmax.f32 %v536, 0.0
    %v544 = vpack.c.bf16 %v540, %v540
    %v545 = vpack.c.bf16 %v541, %v541
    %v546 = vpack.c.bf16 %v542, %v542
    %v547 = vpack.c.bf16 %v543, %v543
    %v548 = vld [vmem:[#allocation7] sm:$0xff]
    %v549 = vld [vmem:[#allocation7 + $0x8] sm:$0xff]
    %v550 = vld [vmem:[#allocation7 + $0x10] sm:$0xff]
    %v551 = vld [vmem:[#allocation7 + $0x18] sm:$0xff]
    %v552 = vld [vmem:[#allocation7 + $0x20] sm:$0xff]
    %v553 = vld [vmem:[#allocation7 + $0x28] sm:$0xff]
    %v554 = vld [vmem:[#allocation7 + $0x30] sm:$0xff]
    %v555 = vld [vmem:[#allocation7 + $0x38] sm:$0xff]
    %v556 = vld [vmem:[#allocation7 + $0x40] sm:$0xff]
    %v557 = vld [vmem:[#allocation7 + $0x48] sm:$0xff]
    %v558 = vld [vmem:[#allocation7 + $0x50] sm:$0xff]
    %v559 = vld [vmem:[#allocation7 + $0x58] sm:$0xff]
    %v560 = vld [vmem:[#allocation7 + $0x60] sm:$0xff]
    %v561 = vld [vmem:[#allocation7 + $0x68] sm:$0xff]
    %v562 = vld [vmem:[#allocation7 + $0x70] sm:$0xff]
    %v563 = vld [vmem:[#allocation7 + $0x78] sm:$0xff]
    %v564 = vld [vmem:[#allocation7 + $0x80] sm:$0xff]
    %v565 = vld [vmem:[#allocation7 + $0x88] sm:$0xff]
    %v566 = vld [vmem:[#allocation7 + $0x90] sm:$0xff]
    %v567 = vld [vmem:[#allocation7 + $0x98] sm:$0xff]
    %v568 = vld [vmem:[#allocation7 + $0xa0] sm:$0xff]
    %v569 = vld [vmem:[#allocation7 + $0xa8] sm:$0xff]
    %v570 = vld [vmem:[#allocation7 + $0xb0] sm:$0xff]
    %v571 = vld [vmem:[#allocation7 + $0xb8] sm:$0xff]
    %v572 = vld [vmem:[#allocation7 + $0xc0] sm:$0xff]
    %v573 = vld [vmem:[#allocation7 + $0xc8] sm:$0xff]
    %v574 = vld [vmem:[#allocation7 + $0xd0] sm:$0xff]
    %v575 = vld [vmem:[#allocation7 + $0xd8] sm:$0xff]
    %v576 = vld [vmem:[#allocation7 + $0xe0] sm:$0xff]
    %v577 = vld [vmem:[#allocation7 + $0xe8] sm:$0xff]
    %v578 = vld [vmem:[#allocation7 + $0xf0] sm:$0xff]
    %v579 = vld [vmem:[#allocation7 + $0xf8] sm:$0xff]
    %v580 = vld [vmem:[#allocation7 + $0x100] sm:$0xff]
    %v581 = vld [vmem:[#allocation7 + $0x108] sm:$0xff]
    %v582 = vld [vmem:[#allocation7 + $0x110] sm:$0xff]
    %v583 = vld [vmem:[#allocation7 + $0x118] sm:$0xff]
    %v584 = vld [vmem:[#allocation7 + $0x120] sm:$0xff]
    %v585 = vld [vmem:[#allocation7 + $0x128] sm:$0xff]
    %v586 = vld [vmem:[#allocation7 + $0x130] sm:$0xff]
    %v587 = vld [vmem:[#allocation7 + $0x138] sm:$0xff]
    %v588 = vld [vmem:[#allocation7 + $0x140] sm:$0xff]
    %v589 = vld [vmem:[#allocation7 + $0x148] sm:$0xff]
    %v590 = vld [vmem:[#allocation7 + $0x150] sm:$0xff]
    %v591 = vld [vmem:[#allocation7 + $0x158] sm:$0xff]
    %v592 = vld [vmem:[#allocation7 + $0x160] sm:$0xff]
    %v593 = vld [vmem:[#allocation7 + $0x168] sm:$0xff]
    %v594 = vld [vmem:[#allocation7 + $0x170] sm:$0xff]
    %v595 = vld [vmem:[#allocation7 + $0x178] sm:$0xff]
    %v596 = vld [vmem:[#allocation7 + $0x180] sm:$0xff]
    %v597 = vld [vmem:[#allocation7 + $0x188] sm:$0xff]
    %v598 = vld [vmem:[#allocation7 + $0x190] sm:$0xff]
    %v599 = vld [vmem:[#allocation7 + $0x198] sm:$0xff]
    %v600 = vld [vmem:[#allocation7 + $0x1a0] sm:$0xff]
    %v601 = vld [vmem:[#allocation7 + $0x1a8] sm:$0xff]
    %v602 = vld [vmem:[#allocation7 + $0x1b0] sm:$0xff]
    %v603 = vld [vmem:[#allocation7 + $0x1b8] sm:$0xff]
    %v604 = vld [vmem:[#allocation7 + $0x1c0] sm:$0xff]
    %v605 = vld [vmem:[#allocation7 + $0x1c8] sm:$0xff]
    %v606 = vld [vmem:[#allocation7 + $0x1d0] sm:$0xff]
    %v607 = vld [vmem:[#allocation7 + $0x1d8] sm:$0xff]
    %v608 = vld [vmem:[#allocation7 + $0x1e0] sm:$0xff]
    %v609 = vld [vmem:[#allocation7 + $0x1e8] sm:$0xff]
    %v610 = vld [vmem:[#allocation7 + $0x1f0] sm:$0xff]
    %v611 = vld [vmem:[#allocation7 + $0x1f8] sm:$0xff]
    %v612 = vld [vmem:[#allocation7 + $0x200] sm:$0xff]
    %v613 = vld [vmem:[#allocation7 + $0x208] sm:$0xff]
    %v614 = vld [vmem:[#allocation7 + $0x210] sm:$0xff]
    %v615 = vld [vmem:[#allocation7 + $0x218] sm:$0xff]
    %v616 = vld [vmem:[#allocation7 + $0x220] sm:$0xff]
    %v617 = vld [vmem:[#allocation7 + $0x228] sm:$0xff]
    %v618 = vld [vmem:[#allocation7 + $0x230] sm:$0xff]
    %v619 = vld [vmem:[#allocation7 + $0x238] sm:$0xff]
    %v620 = vld [vmem:[#allocation7 + $0x240] sm:$0xff]
    %v621 = vld [vmem:[#allocation7 + $0x248] sm:$0xff]
    %v622 = vld [vmem:[#allocation7 + $0x250] sm:$0xff]
    %v623 = vld [vmem:[#allocation7 + $0x258] sm:$0xff]
    %v624 = vld [vmem:[#allocation7 + $0x260] sm:$0xff]
    %v625 = vld [vmem:[#allocation7 + $0x268] sm:$0xff]
    %v626 = vld [vmem:[#allocation7 + $0x270] sm:$0xff]
    %v627 = vld [vmem:[#allocation7 + $0x278] sm:$0xff]
    %v628 = vld [vmem:[#allocation7 + $0x280] sm:$0xff]
    %v629 = vld [vmem:[#allocation7 + $0x288] sm:$0xff]
    %v630 = vld [vmem:[#allocation7 + $0x290] sm:$0xff]
    %v631 = vld [vmem:[#allocation7 + $0x298] sm:$0xff]
    %v632 = vld [vmem:[#allocation7 + $0x2a0] sm:$0xff]
    %v633 = vld [vmem:[#allocation7 + $0x2a8] sm:$0xff]
    %v634 = vld [vmem:[#allocation7 + $0x2b0] sm:$0xff]
    %v635 = vld [vmem:[#allocation7 + $0x2b8] sm:$0xff]
    %v636 = vld [vmem:[#allocation7 + $0x2c0] sm:$0xff]
    %v637 = vld [vmem:[#allocation7 + $0x2c8] sm:$0xff]
    %v638 = vld [vmem:[#allocation7 + $0x2d0] sm:$0xff]
    %v639 = vld [vmem:[#allocation7 + $0x2d8] sm:$0xff]
    %v640 = vld [vmem:[#allocation7 + $0x2e0] sm:$0xff]
    %v641 = vld [vmem:[#allocation7 + $0x2e8] sm:$0xff]
    %v642 = vld [vmem:[#allocation7 + $0x2f0] sm:$0xff]
    %v643 = vld [vmem:[#allocation7 + $0x2f8] sm:$0xff]
    %v644 = vld [vmem:[#allocation7 + $0x300] sm:$0xff]
    %v645 = vld [vmem:[#allocation7 + $0x308] sm:$0xff]
    %v646 = vld [vmem:[#allocation7 + $0x310] sm:$0xff]
    %v647 = vld [vmem:[#allocation7 + $0x318] sm:$0xff]
    %v648 = vld [vmem:[#allocation7 + $0x320] sm:$0xff]
    %v649 = vld [vmem:[#allocation7 + $0x328] sm:$0xff]
    %v650 = vld [vmem:[#allocation7 + $0x330] sm:$0xff]
    %v651 = vld [vmem:[#allocation7 + $0x338] sm:$0xff]
    %v652 = vld [vmem:[#allocation7 + $0x340] sm:$0xff]
    %v653 = vld [vmem:[#allocation7 + $0x348] sm:$0xff]
    %v654 = vld [vmem:[#allocation7 + $0x350] sm:$0xff]
    %v655 = vld [vmem:[#allocation7 + $0x358] sm:$0xff]
    %v656 = vld [vmem:[#allocation7 + $0x360] sm:$0xff]
    %v657 = vld [vmem:[#allocation7 + $0x368] sm:$0xff]
    %v658 = vld [vmem:[#allocation7 + $0x370] sm:$0xff]
    %v659 = vld [vmem:[#allocation7 + $0x378] sm:$0xff]
    %v660 = vld [vmem:[#allocation7 + $0x380] sm:$0xff]
    %v661 = vld [vmem:[#allocation7 + $0x388] sm:$0xff]
    %v662 = vld [vmem:[#allocation7 + $0x390] sm:$0xff]
    %v663 = vld [vmem:[#allocation7 + $0x398] sm:$0xff]
    %v664 = vld [vmem:[#allocation7 + $0x3a0] sm:$0xff]
    %v665 = vld [vmem:[#allocation7 + $0x3a8] sm:$0xff]
    %v666 = vld [vmem:[#allocation7 + $0x3b0] sm:$0xff]
    %v667 = vld [vmem:[#allocation7 + $0x3b8] sm:$0xff]
    %v668 = vld [vmem:[#allocation7 + $0x3c0] sm:$0xff]
    %v669 = vld [vmem:[#allocation7 + $0x3c8] sm:$0xff]
    %v670 = vld [vmem:[#allocation7 + $0x3d0] sm:$0xff]
    %v671 = vld [vmem:[#allocation7 + $0x3d8] sm:$0xff]
    %v672 = vld [vmem:[#allocation7 + $0x3e0] sm:$0xff]
    %v673 = vld [vmem:[#allocation7 + $0x3e8] sm:$0xff]
    %v674 = vld [vmem:[#allocation7 + $0x3f0] sm:$0xff]
    %v675 = vld [vmem:[#allocation7 + $0x3f8] sm:$0xff]
    %v676 = vld [vmem:[%s4] sm:$0xf]
    %v678 = vlaneseq
    %v679 = vshrl.u32 %v678, 7
    %v680 = vsub.s32 0, %v679
    %v681 = vrot.slane %v676, %v680
    %v682 = vlaneseq
    %v683 = vshrl.u32 %v682, 7
    %v684 = vsub.s32 1, %v683
    %v685 = vrot.slane %v676, %v684
    %v686 = vlaneseq
    %v687 = vshrl.u32 %v686, 7
    %v688 = vsub.s32 2, %v687
    %v689 = vrot.slane %v676, %v688
    %v690 = vlaneseq
    %v691 = vshrl.u32 %v690, 7
    %v692 = vsub.s32 3, %v691
    %v693 = vrot.slane %v676, %v692
    %v826 = vunpack.c.l.b16 %v548
    %v827 = vunpack.c.h.b16 %v548
    %v828 = vunpack.c.l.b16 %v549
    %v829 = vunpack.c.h.b16 %v549
    %v830 = vunpack.c.l.b16 %v550
    %v831 = vunpack.c.h.b16 %v550
    %v832 = vunpack.c.l.b16 %v551
    %v833 = vunpack.c.h.b16 %v551
    %v834 = vunpack.c.l.b16 %v552
    %v835 = vunpack.c.h.b16 %v552
    %v836 = vunpack.c.l.b16 %v553
    %v837 = vunpack.c.h.b16 %v553
    %v838 = vunpack.c.l.b16 %v554
    %v839 = vunpack.c.h.b16 %v554
    %v840 = vunpack.c.l.b16 %v555
    %v841 = vunpack.c.h.b16 %v555
    %v842 = vunpack.c.l.b16 %v556
    %v843 = vunpack.c.h.b16 %v556
    %v844 = vunpack.c.l.b16 %v557
    %v845 = vunpack.c.h.b16 %v557
    %v846 = vunpack.c.l.b16 %v558
    %v847 = vunpack.c.h.b16 %v558
    %v848 = vunpack.c.l.b16 %v559
    %v849 = vunpack.c.h.b16 %v559
    %v850 = vunpack.c.l.b16 %v560
    %v851 = vunpack.c.h.b16 %v560
    %v852 = vunpack.c.l.b16 %v561
    %v853 = vunpack.c.h.b16 %v561
    %v854 = vunpack.c.l.b16 %v562
    %v855 = vunpack.c.h.b16 %v562
    %v856 = vunpack.c.l.b16 %v563
    %v857 = vunpack.c.h.b16 %v563
    %v858 = vunpack.c.l.b16 %v564
    %v859 = vunpack.c.h.b16 %v564
    %v860 = vunpack.c.l.b16 %v565
    %v861 = vunpack.c.h.b16 %v565
    %v862 = vunpack.c.l.b16 %v566
    %v863 = vunpack.c.h.b16 %v566
    %v864 = vunpack.c.l.b16 %v567
    %v865 = vunpack.c.h.b16 %v567
    %v866 = vunpack.c.l.b16 %v568
    %v867 = vunpack.c.h.b16 %v568
    %v868 = vunpack.c.l.b16 %v569
    %v869 = vunpack.c.h.b16 %v569
    %v870 = vunpack.c.l.b16 %v570
    %v871 = vunpack.c.h.b16 %v570
    %v872 = vunpack.c.l.b16 %v571
    %v873 = vunpack.c.h.b16 %v571
    %v874 = vunpack.c.l.b16 %v572
    %v875 = vunpack.c.h.b16 %v572
    %v876 = vunpack.c.l.b16 %v573
    %v877 = vunpack.c.h.b16 %v573
    %v878 = vunpack.c.l.b16 %v574
    %v879 = vunpack.c.h.b16 %v574
    %v880 = vunpack.c.l.b16 %v575
    %v881 = vunpack.c.h.b16 %v575
    %v882 = vunpack.c.l.b16 %v576
    %v883 = vunpack.c.h.b16 %v576
    %v884 = vunpack.c.l.b16 %v577
    %v885 = vunpack.c.h.b16 %v577
    %v886 = vunpack.c.l.b16 %v578
    %v887 = vunpack.c.h.b16 %v578
    %v888 = vunpack.c.l.b16 %v579
    %v889 = vunpack.c.h.b16 %v579
    %v890 = vunpack.c.l.b16 %v580
    %v891 = vunpack.c.h.b16 %v580
    %v892 = vunpack.c.l.b16 %v581
    %v893 = vunpack.c.h.b16 %v581
    %v894 = vunpack.c.l.b16 %v582
    %v895 = vunpack.c.h.b16 %v582
    %v896 = vunpack.c.l.b16 %v583
    %v897 = vunpack.c.h.b16 %v583
    %v898 = vunpack.c.l.b16 %v584
    %v899 = vunpack.c.h.b16 %v584
    %v900 = vunpack.c.l.b16 %v585
    %v901 = vunpack.c.h.b16 %v585
    %v902 = vunpack.c.l.b16 %v586
    %v903 = vunpack.c.h.b16 %v586
    %v904 = vunpack.c.l.b16 %v587
    %v905 = vunpack.c.h.b16 %v587
    %v906 = vunpack.c.l.b16 %v588
    %v907 = vunpack.c.h.b16 %v588
    %v908 = vunpack.c.l.b16 %v589
    %v909 = vunpack.c.h.b16 %v589
    %v910 = vunpack.c.l.b16 %v590
    %v911 = vunpack.c.h.b16 %v590
    %v912 = vunpack.c.l.b16 %v591
    %v913 = vunpack.c.h.b16 %v591
    %v914 = vunpack.c.l.b16 %v592
    %v915 = vunpack.c.h.b16 %v592
    %v916 = vunpack.c.l.b16 %v593
    %v917 = vunpack.c.h.b16 %v593
    %v918 = vunpack.c.l.b16 %v594
    %v919 = vunpack.c.h.b16 %v594
    %v920 = vunpack.c.l.b16 %v595
    %v921 = vunpack.c.h.b16 %v595
    %v922 = vunpack.c.l.b16 %v596
    %v923 = vunpack.c.h.b16 %v596
    %v924 = vunpack.c.l.b16 %v597
    %v925 = vunpack.c.h.b16 %v597
    %v926 = vunpack.c.l.b16 %v598
    %v927 = vunpack.c.h.b16 %v598
    %v928 = vunpack.c.l.b16 %v599
    %v929 = vunpack.c.h.b16 %v599
    %v930 = vunpack.c.l.b16 %v600
    %v931 = vunpack.c.h.b16 %v600
    %v932 = vunpack.c.l.b16 %v601
    %v933 = vunpack.c.h.b16 %v601
    %v934 = vunpack.c.l.b16 %v602
    %v935 = vunpack.c.h.b16 %v602
    %v936 = vunpack.c.l.b16 %v603
    %v937 = vunpack.c.h.b16 %v603
    %v938 = vunpack.c.l.b16 %v604
    %v939 = vunpack.c.h.b16 %v604
    %v940 = vunpack.c.l.b16 %v605
    %v941 = vunpack.c.h.b16 %v605
    %v942 = vunpack.c.l.b16 %v606
    %v943 = vunpack.c.h.b16 %v606
    %v944 = vunpack.c.l.b16 %v607
    %v945 = vunpack.c.h.b16 %v607
    %v946 = vunpack.c.l.b16 %v608
    %v947 = vunpack.c.h.b16 %v608
    %v948 = vunpack.c.l.b16 %v609
    %v949 = vunpack.c.h.b16 %v609
    %v950 = vunpack.c.l.b16 %v610
    %v951 = vunpack.c.h.b16 %v610
    %v952 = vunpack.c.l.b16 %v611
    %v953 = vunpack.c.h.b16 %v611
    %v954 = vunpack.c.l.b16 %v612
    %v955 = vunpack.c.h.b16 %v612
    %v956 = vunpack.c.l.b16 %v613
    %v957 = vunpack.c.h.b16 %v613
    %v958 = vunpack.c.l.b16 %v614
    %v959 = vunpack.c.h.b16 %v614
    %v960 = vunpack.c.l.b16 %v615
    %v961 = vunpack.c.h.b16 %v615
    %v962 = vunpack.c.l.b16 %v616
    %v963 = vunpack.c.h.b16 %v616
    %v964 = vunpack.c.l.b16 %v617
    %v965 = vunpack.c.h.b16 %v617
    %v966 = vunpack.c.l.b16 %v618
    %v967 = vunpack.c.h.b16 %v618
    %v968 = vunpack.c.l.b16 %v619
    %v969 = vunpack.c.h.b16 %v619
    %v970 = vunpack.c.l.b16 %v620
    %v971 = vunpack.c.h.b16 %v620
    %v972 = vunpack.c.l.b16 %v621
    %v973 = vunpack.c.h.b16 %v621
    %v974 = vunpack.c.l.b16 %v622
    %v975 = vunpack.c.h.b16 %v622
    %v976 = vunpack.c.l.b16 %v623
    %v977 = vunpack.c.h.b16 %v623
    %v978 = vunpack.c.l.b16 %v624
    %v979 = vunpack.c.h.b16 %v624
    %v980 = vunpack.c.l.b16 %v625
    %v981 = vunpack.c.h.b16 %v625
    %v982 = vunpack.c.l.b16 %v626
    %v983 = vunpack.c.h.b16 %v626
    %v984 = vunpack.c.l.b16 %v627
    %v985 = vunpack.c.h.b16 %v627
    %v986 = vunpack.c.l.b16 %v628
    %v987 = vunpack.c.h.b16 %v628
    %v988 = vunpack.c.l.b16 %v629
    %v989 = vunpack.c.h.b16 %v629
    %v990 = vunpack.c.l.b16 %v630
    %v991 = vunpack.c.h.b16 %v630
    %v992 = vunpack.c.l.b16 %v631
    %v993 = vunpack.c.h.b16 %v631
    %v994 = vunpack.c.l.b16 %v632
    %v995 = vunpack.c.h.b16 %v632
    %v996 = vunpack.c.l.b16 %v633
    %v997 = vunpack.c.h.b16 %v633
    %v998 = vunpack.c.l.b16 %v634
    %v999 = vunpack.c.h.b16 %v634
    %v1000 = vunpack.c.l.b16 %v635
    %v1001 = vunpack.c.h.b16 %v635
    %v1002 = vunpack.c.l.b16 %v636
    %v1003 = vunpack.c.h.b16 %v636
    %v1004 = vunpack.c.l.b16 %v637
    %v1005 = vunpack.c.h.b16 %v637
    %v1006 = vunpack.c.l.b16 %v638
    %v1007 = vunpack.c.h.b16 %v638
    %v1008 = vunpack.c.l.b16 %v639
    %v1009 = vunpack.c.h.b16 %v639
    %v1010 = vunpack.c.l.b16 %v640
    %v1011 = vunpack.c.h.b16 %v640
    %v1012 = vunpack.c.l.b16 %v641
    %v1013 = vunpack.c.h.b16 %v641
    %v1014 = vunpack.c.l.b16 %v642
    %v1015 = vunpack.c.h.b16 %v642
    %v1016 = vunpack.c.l.b16 %v643
    %v1017 = vunpack.c.h.b16 %v643
    %v1018 = vunpack.c.l.b16 %v644
    %v1019 = vunpack.c.h.b16 %v644
    %v1020 = vunpack.c.l.b16 %v645
    %v1021 = vunpack.c.h.b16 %v645
    %v1022 = vunpack.c.l.b16 %v646
    %v1023 = vunpack.c.h.b16 %v646
    %v1024 = vunpack.c.l.b16 %v647
    %v1025 = vunpack.c.h.b16 %v647
    %v1026 = vunpack.c.l.b16 %v648
    %v1027 = vunpack.c.h.b16 %v648
    %v1028 = vunpack.c.l.b16 %v649
    %v1029 = vunpack.c.h.b16 %v649
    %v1030 = vunpack.c.l.b16 %v650
    %v1031 = vunpack.c.h.b16 %v650
    %v1032 = vunpack.c.l.b16 %v651
    %v1033 = vunpack.c.h.b16 %v651
    %v1034 = vunpack.c.l.b16 %v652
    %v1035 = vunpack.c.h.b16 %v652
    %v1036 = vunpack.c.l.b16 %v653
    %v1037 = vunpack.c.h.b16 %v653
    %v1038 = vunpack.c.l.b16 %v654
    %v1039 = vunpack.c.h.b16 %v654
    %v1040 = vunpack.c.l.b16 %v655
    %v1041 = vunpack.c.h.b16 %v655
    %v1042 = vunpack.c.l.b16 %v656
    %v1043 = vunpack.c.h.b16 %v656
    %v1044 = vunpack.c.l.b16 %v657
    %v1045 = vunpack.c.h.b16 %v657
    %v1046 = vunpack.c.l.b16 %v658
    %v1047 = vunpack.c.h.b16 %v658
    %v1048 = vunpack.c.l.b16 %v659
    %v1049 = vunpack.c.h.b16 %v659
    %v1050 = vunpack.c.l.b16 %v660
    %v1051 = vunpack.c.h.b16 %v660
    %v1052 = vunpack.c.l.b16 %v661
    %v1053 = vunpack.c.h.b16 %v661
    %v1054 = vunpack.c.l.b16 %v662
    %v1055 = vunpack.c.h.b16 %v662
    %v1056 = vunpack.c.l.b16 %v663
    %v1057 = vunpack.c.h.b16 %v663
    %v1058 = vunpack.c.l.b16 %v664
    %v1059 = vunpack.c.h.b16 %v664
    %v1060 = vunpack.c.l.b16 %v665
    %v1061 = vunpack.c.h.b16 %v665
    %v1062 = vunpack.c.l.b16 %v666
    %v1063 = vunpack.c.h.b16 %v666
    %v1064 = vunpack.c.l.b16 %v667
    %v1065 = vunpack.c.h.b16 %v667
    %v1066 = vunpack.c.l.b16 %v668
    %v1067 = vunpack.c.h.b16 %v668
    %v1068 = vunpack.c.l.b16 %v669
    %v1069 = vunpack.c.h.b16 %v669
    %v1070 = vunpack.c.l.b16 %v670
    %v1071 = vunpack.c.h.b16 %v670
    %v1072 = vunpack.c.l.b16 %v671
    %v1073 = vunpack.c.h.b16 %v671
    %v1074 = vunpack.c.l.b16 %v672
    %v1075 = vunpack.c.h.b16 %v672
    %v1076 = vunpack.c.l.b16 %v673
    %v1077 = vunpack.c.h.b16 %v673
    %v1078 = vunpack.c.l.b16 %v674
    %v1079 = vunpack.c.h.b16 %v674
    %v1080 = vunpack.c.l.b16 %v675
    %v1081 = vunpack.c.h.b16 %v675
    %v1082 = vpack.c.b16 %v830, %v826
    %v1083 = vpack.c.b16 %v831, %v827
    %v1084 = vpack.c.b16 %v832, %v828
    %v1085 = vpack.c.b16 %v833, %v829
    %v1086 = vpack.c.b16 %v838, %v834
    %v1087 = vpack.c.b16 %v839, %v835
    %v1088 = vpack.c.b16 %v840, %v836
    %v1089 = vpack.c.b16 %v841, %v837
    %v1090 = vpack.c.b16 %v846, %v842
    %v1091 = vpack.c.b16 %v847, %v843
    %v1092 = vpack.c.b16 %v848, %v844
    %v1093 = vpack.c.b16 %v849, %v845
    %v1094 = vpack.c.b16 %v854, %v850
    %v1095 = vpack.c.b16 %v855, %v851
    %v1096 = vpack.c.b16 %v856, %v852
    %v1097 = vpack.c.b16 %v857, %v853
    %v1098 = vpack.c.b16 %v862, %v858
    %v1099 = vpack.c.b16 %v863, %v859
    %v1100 = vpack.c.b16 %v864, %v860
    %v1101 = vpack.c.b16 %v865, %v861
    %v1102 = vpack.c.b16 %v870, %v866
    %v1103 = vpack.c.b16 %v871, %v867
    %v1104 = vpack.c.b16 %v872, %v868
    %v1105 = vpack.c.b16 %v873, %v869
    %v1106 = vpack.c.b16 %v878, %v874
    %v1107 = vpack.c.b16 %v879, %v875
    %v1108 = vpack.c.b16 %v880, %v876
    %v1109 = vpack.c.b16 %v881, %v877
    %v1110 = vpack.c.b16 %v886, %v882
    %v1111 = vpack.c.b16 %v887, %v883
    %v1112 = vpack.c.b16 %v888, %v884
    %v1113 = vpack.c.b16 %v889, %v885
    %v1114 = vpack.c.b16 %v894, %v890
    %v1115 = vpack.c.b16 %v895, %v891
    %v1116 = vpack.c.b16 %v896, %v892
    %v1117 = vpack.c.b16 %v897, %v893
    %v1118 = vpack.c.b16 %v902, %v898
    %v1119 = vpack.c.b16 %v903, %v899
    %v1120 = vpack.c.b16 %v904, %v900
    %v1121 = vpack.c.b16 %v905, %v901
    %v1122 = vpack.c.b16 %v910, %v906
    %v1123 = vpack.c.b16 %v911, %v907
    %v1124 = vpack.c.b16 %v912, %v908
    %v1125 = vpack.c.b16 %v913, %v909
    %v1126 = vpack.c.b16 %v918, %v914
    %v1127 = vpack.c.b16 %v919, %v915
    %v1128 = vpack.c.b16 %v920, %v916
    %v1129 = vpack.c.b16 %v921, %v917
    %v1130 = vpack.c.b16 %v926, %v922
    %v1131 = vpack.c.b16 %v927, %v923
    %v1132 = vpack.c.b16 %v928, %v924
    %v1133 = vpack.c.b16 %v929, %v925
    %v1134 = vpack.c.b16 %v934, %v930
    %v1135 = vpack.c.b16 %v935, %v931
    %v1136 = vpack.c.b16 %v936, %v932
    %v1137 = vpack.c.b16 %v937, %v933
    %v1138 = vpack.c.b16 %v942, %v938
    %v1139 = vpack.c.b16 %v943, %v939
    %v1140 = vpack.c.b16 %v944, %v940
    %v1141 = vpack.c.b16 %v945, %v941
    %v1142 = vpack.c.b16 %v950, %v946
    %v1143 = vpack.c.b16 %v951, %v947
    %v1144 = vpack.c.b16 %v952, %v948
    %v1145 = vpack.c.b16 %v953, %v949
    %v1146 = vpack.c.b16 %v958, %v954
    %v1147 = vpack.c.b16 %v959, %v955
    %v1148 = vpack.c.b16 %v960, %v956
    %v1149 = vpack.c.b16 %v961, %v957
    %v1150 = vpack.c.b16 %v966, %v962
    %v1151 = vpack.c.b16 %v967, %v963
    %v1152 = vpack.c.b16 %v968, %v964
    %v1153 = vpack.c.b16 %v969, %v965
    %v1154 = vpack.c.b16 %v974, %v970
    %v1155 = vpack.c.b16 %v975, %v971
    %v1156 = vpack.c.b16 %v976, %v972
    %v1157 = vpack.c.b16 %v977, %v973
    %v1158 = vpack.c.b16 %v982, %v978
    %v1159 = vpack.c.b16 %v983, %v979
    %v1160 = vpack.c.b16 %v984, %v980
    %v1161 = vpack.c.b16 %v985, %v981
    %v1162 = vpack.c.b16 %v990, %v986
    %v1163 = vpack.c.b16 %v991, %v987
    %v1164 = vpack.c.b16 %v992, %v988
    %v1165 = vpack.c.b16 %v993, %v989
    %v1166 = vpack.c.b16 %v998, %v994
    %v1167 = vpack.c.b16 %v999, %v995
    %v1168 = vpack.c.b16 %v1000, %v996
    %v1169 = vpack.c.b16 %v1001, %v997
    %v1170 = vpack.c.b16 %v1006, %v1002
    %v1171 = vpack.c.b16 %v1007, %v1003
    %v1172 = vpack.c.b16 %v1008, %v1004
    %v1173 = vpack.c.b16 %v1009, %v1005
    %v1174 = vpack.c.b16 %v1014, %v1010
    %v1175 = vpack.c.b16 %v1015, %v1011
    %v1176 = vpack.c.b16 %v1016, %v1012
    %v1177 = vpack.c.b16 %v1017, %v1013
    %v1178 = vpack.c.b16 %v1022, %v1018
    %v1179 = vpack.c.b16 %v1023, %v1019
    %v1180 = vpack.c.b16 %v1024, %v1020
    %v1181 = vpack.c.b16 %v1025, %v1021
    %v1182 = vpack.c.b16 %v1030, %v1026
    %v1183 = vpack.c.b16 %v1031, %v1027
    %v1184 = vpack.c.b16 %v1032, %v1028
    %v1185 = vpack.c.b16 %v1033, %v1029
    %v1186 = vpack.c.b16 %v1038, %v1034
    %v1187 = vpack.c.b16 %v1039, %v1035
    %v1188 = vpack.c.b16 %v1040, %v1036
    %v1189 = vpack.c.b16 %v1041, %v1037
    %v1190 = vpack.c.b16 %v1046, %v1042
    %v1191 = vpack.c.b16 %v1047, %v1043
    %v1192 = vpack.c.b16 %v1048, %v1044
    %v1193 = vpack.c.b16 %v1049, %v1045
    %v1194 = vpack.c.b16 %v1054, %v1050
    %v1195 = vpack.c.b16 %v1055, %v1051
    %v1196 = vpack.c.b16 %v1056, %v1052
    %v1197 = vpack.c.b16 %v1057, %v1053
    %v1198 = vpack.c.b16 %v1062, %v1058
    %v1199 = vpack.c.b16 %v1063, %v1059
    %v1200 = vpack.c.b16 %v1064, %v1060
    %v1201 = vpack.c.b16 %v1065, %v1061
    %v1202 = vpack.c.b16 %v1070, %v1066
    %v1203 = vpack.c.b16 %v1071, %v1067
    %v1204 = vpack.c.b16 %v1072, %v1068
    %v1205 = vpack.c.b16 %v1073, %v1069
    %v1206 = vpack.c.b16 %v1078, %v1074
    %v1207 = vpack.c.b16 %v1079, %v1075
    %v1208 = vpack.c.b16 %v1080, %v1076
    %v1209 = vpack.c.b16 %v1081, %v1077
    %1338 = vmatprep.subr.bf16.mxu0 %v1083
    %1339 = vmatpush1.bf16.msra.mxu0 %v1082
    %1340 = vmatprep.subr.bf16.mxu0 %v1087
    %1341 = vmatpush1.bf16.msra.mxu0 %v1086
    %1342 = vmatprep.subr.bf16.mxu0 %v1091
    %1343 = vmatpush1.bf16.msra.mxu0 %v1090
    %1344 = vmatprep.subr.bf16.mxu0 %v1095
    %1345 = vmatpush1.bf16.msra.mxu0 %v1094
    %1346 = vmatprep.subr.bf16.mxu0 %v1099
    %1347 = vmatpush1.bf16.msra.mxu0 %v1098
    %1348 = vmatprep.subr.bf16.mxu0 %v1103
    %1349 = vmatpush1.bf16.msra.mxu0 %v1102
    %1350 = vmatprep.subr.bf16.mxu0 %v1107
    %1351 = vmatpush1.bf16.msra.mxu0 %v1106
    %1352 = vmatprep.subr.bf16.mxu0 %v1111
    %1353 = vmatpush1.bf16.msra.mxu0 %v1110
    %1354 = vmatprep.subr.bf16.mxu0 %v1115
    %1355 = vmatpush1.bf16.msra.mxu0 %v1114
    %1356 = vmatprep.subr.bf16.mxu0 %v1119
    %1357 = vmatpush1.bf16.msra.mxu0 %v1118
    %1358 = vmatprep.subr.bf16.mxu0 %v1123
    %1359 = vmatpush1.bf16.msra.mxu0 %v1122
    %1360 = vmatprep.subr.bf16.mxu0 %v1127
    %1361 = vmatpush1.bf16.msra.mxu0 %v1126
    %1362 = vmatprep.subr.bf16.mxu0 %v1131
    %1363 = vmatpush1.bf16.msra.mxu0 %v1130
    %1364 = vmatprep.subr.bf16.mxu0 %v1135
    %1365 = vmatpush1.bf16.msra.mxu0 %v1134
    %1366 = vmatprep.subr.bf16.mxu0 %v1139
    %1367 = vmatpush1.bf16.msra.mxu0 %v1138
    %1368 = vmatprep.subr.bf16.mxu0 %v1143
    %1369 = vmatpush1.bf16.msra.mxu0 %v1142
    %1370 = vmatprep.mubr.bf16.mxu0 %v545
    %1371 = vmatmul.mubr.bf16.gmra.mrb[0].mxu0 %v544
    %v1372 = vpop.f32.mrb[0].mxu0
    %v1373 = vadd.f32 %v681, %v1372
    %v1374 = vpop.f32.mrb[0].mxu0
    %v1375 = vadd.f32 %v685, %v1374
    %v1376 = vpop.f32.mrb[0].mxu0
    %v1377 = vpop.f32.mrb[0].mxu0
    %1378 = vdwg.mxu0
    %1379 = vmatprep.subr.bf16.mxu0 %v1147
    %1380 = vmatpush1.bf16.msra.mxu0 %v1146
    %1381 = vmatprep.subr.bf16.mxu0 %v1151
    %1382 = vmatpush1.bf16.msra.mxu0 %v1150
    %1383 = vmatprep.subr.bf16.mxu0 %v1155
    %1384 = vmatpush1.bf16.msra.mxu0 %v1154
    %1385 = vmatprep.subr.bf16.mxu0 %v1159
    %1386 = vmatpush1.bf16.msra.mxu0 %v1158
    %1387 = vmatprep.subr.bf16.mxu0 %v1163
    %1388 = vmatpush1.bf16.msra.mxu0 %v1162
    %1389 = vmatprep.subr.bf16.mxu0 %v1167
    %1390 = vmatpush1.bf16.msra.mxu0 %v1166
    %1391 = vmatprep.subr.bf16.mxu0 %v1171
    %1392 = vmatpush1.bf16.msra.mxu0 %v1170
    %1393 = vmatprep.subr.bf16.mxu0 %v1175
    %1394 = vmatpush1.bf16.msra.mxu0 %v1174
    %1395 = vmatprep.subr.bf16.mxu0 %v1179
    %1396 = vmatpush1.bf16.msra.mxu0 %v1178
    %1397 = vmatprep.subr.bf16.mxu0 %v1183
    %1398 = vmatpush1.bf16.msra.mxu0 %v1182
    %1399 = vmatprep.subr.bf16.mxu0 %v1187
    %1400 = vmatpush1.bf16.msra.mxu0 %v1186
    %1401 = vmatprep.subr.bf16.mxu0 %v1191
    %1402 = vmatpush1.bf16.msra.mxu0 %v1190
    %1403 = vmatprep.subr.bf16.mxu0 %v1195
    %1404 = vmatpush1.bf16.msra.mxu0 %v1194
    %1405 = vmatprep.subr.bf16.mxu0 %v1199
    %1406 = vmatpush1.bf16.msra.mxu0 %v1198
    %1407 = vmatprep.subr.bf16.mxu0 %v1203
    %1408 = vmatpush1.bf16.msra.mxu0 %v1202
    %1409 = vmatprep.subr.bf16.mxu0 %v1207
    %1410 = vmatpush1.bf16.msra.mxu0 %v1206
    %1411 = vmatprep.mubr.bf16.mxu0 %v547
    %1412 = vmatmul.mubr.bf16.gmra.mrb[0].mxu0 %v546
    %v1413 = vpop.f32.mrb[0].mxu0
    %v1414 = vadd.f32 %v1373, %v1413
    %v1415 = vpop.f32.mrb[0].mxu0
    %v1416 = vadd.f32 %v1375, %v1415
    %v1417 = vpop.f32.mrb[0].mxu0
    %v1418 = vpop.f32.mrb[0].mxu0
    %1419 = vdwg.mxu0
    %1420 = vmatprep.subr.bf16.mxu0 %v1085
    %1421 = vmatpush1.bf16.msra.mxu0 %v1084
    %1422 = vmatprep.subr.bf16.mxu0 %v1089
    %1423 = vmatpush1.bf16.msra.mxu0 %v1088
    %1424 = vmatprep.subr.bf16.mxu0 %v1093
    %1425 = vmatpush1.bf16.msra.mxu0 %v1092
    %1426 = vmatprep.subr.bf16.mxu0 %v1097
    %1427 = vmatpush1.bf16.msra.mxu0 %v1096
    %1428 = vmatprep.subr.bf16.mxu0 %v1101
    %1429 = vmatpush1.bf16.msra.mxu0 %v1100
    %1430 = vmatprep.subr.bf16.mxu0 %v1105
    %1431 = vmatpush1.bf16.msra.mxu0 %v1104
    %1432 = vmatprep.subr.bf16.mxu0 %v1109
    %1433 = vmatpush1.bf16.msra.mxu0 %v1108
    %1434 = vmatprep.subr.bf16.mxu0 %v1113
    %1435 = vmatpush1.bf16.msra.mxu0 %v1112
    %1436 = vmatprep.subr.bf16.mxu0 %v1117
    %1437 = vmatpush1.bf16.msra.mxu0 %v1116
    %1438 = vmatprep.subr.bf16.mxu0 %v1121
    %1439 = vmatpush1.bf16.msra.mxu0 %v1120
    %1440 = vmatprep.subr.bf16.mxu0 %v1125
    %1441 = vmatpush1.bf16.msra.mxu0 %v1124
    %1442 = vmatprep.subr.bf16.mxu0 %v1129
    %1443 = vmatpush1.bf16.msra.mxu0 %v1128
    %1444 = vmatprep.subr.bf16.mxu0 %v1133
    %1445 = vmatpush1.bf16.msra.mxu0 %v1132
    %1446 = vmatprep.subr.bf16.mxu0 %v1137
    %1447 = vmatpush1.bf16.msra.mxu0 %v1136
    %1448 = vmatprep.subr.bf16.mxu0 %v1141
    %1449 = vmatpush1.bf16.msra.mxu0 %v1140
    %1450 = vmatprep.subr.bf16.mxu0 %v1145
    %1451 = vmatpush1.bf16.msra.mxu0 %v1144
    %1452 = vmatprep.mubr.bf16.mxu0 %v545
    %1453 = vmatmul.mubr.bf16.gmra.mrb[0].mxu0 %v544
    %v1454 = vpop.f32.mrb[0].mxu0
    %v1455 = vadd.f32 %v689, %v1454
    %v1456 = vpop.f32.mrb[0].mxu0
    %v1457 = vadd.f32 %v693, %v1456
    %v1458 = vpop.f32.mrb[0].mxu0
    %v1459 = vpop.f32.mrb[0].mxu0
    %1460 = vdwg.mxu0
    %1461 = vmatprep.subr.bf16.mxu0 %v1149
    %1462 = vmatpush1.bf16.msra.mxu0 %v1148
    %1463 = vmatprep.subr.bf16.mxu0 %v1153
    %1464 = vmatpush1.bf16.msra.mxu0 %v1152
    %1465 = vmatprep.subr.bf16.mxu0 %v1157
    %1466 = vmatpush1.bf16.msra.mxu0 %v1156
    %1467 = vmatprep.subr.bf16.mxu0 %v1161
    %1468 = vmatpush1.bf16.msra.mxu0 %v1160
    %1469 = vmatprep.subr.bf16.mxu0 %v1165
    %1470 = vmatpush1.bf16.msra.mxu0 %v1164
    %1471 = vmatprep.subr.bf16.mxu0 %v1169
    %1472 = vmatpush1.bf16.msra.mxu0 %v1168
    %1473 = vmatprep.subr.bf16.mxu0 %v1173
    %1474 = vmatpush1.bf16.msra.mxu0 %v1172
    %1475 = vmatprep.subr.bf16.mxu0 %v1177
    %1476 = vmatpush1.bf16.msra.mxu0 %v1176
    %1477 = vmatprep.subr.bf16.mxu0 %v1181
    %1478 = vmatpush1.bf16.msra.mxu0 %v1180
    %1479 = vmatprep.subr.bf16.mxu0 %v1185
    %1480 = vmatpush1.bf16.msra.mxu0 %v1184
    %1481 = vmatprep.subr.bf16.mxu0 %v1189
    %1482 = vmatpush1.bf16.msra.mxu0 %v1188
    %1483 = vmatprep.subr.bf16.mxu0 %v1193
    %1484 = vmatpush1.bf16.msra.mxu0 %v1192
    %1485 = vmatprep.subr.bf16.mxu0 %v1197
    %1486 = vmatpush1.bf16.msra.mxu0 %v1196
    %1487 = vmatprep.subr.bf16.mxu0 %v1201
    %1488 = vmatpush1.bf16.msra.mxu0 %v1200
    %1489 = vmatprep.subr.bf16.mxu0 %v1205
    %1490 = vmatpush1.bf16.msra.mxu0 %v1204
    %1491 = vmatprep.subr.bf16.mxu0 %v1209
    %1492 = vmatpush1.bf16.msra.mxu0 %v1208
    %1493 = vmatprep.mubr.bf16.mxu0 %v547
    %1494 = vmatmul.mubr.bf16.gmra.mrb[0].mxu0 %v546
    %v1495 = vpop.f32.mrb[0].mxu0
    %v1496 = vadd.f32 %v1455, %v1495
    %v1497 = vpop.f32.mrb[0].mxu0
    %v1498 = vadd.f32 %v1457, %v1497
    %v1499 = vpop.f32.mrb[0].mxu0
    %v1500 = vpop.f32.mrb[0].mxu0
    %1501 = vdwg.mxu0
    %v1502 = vmax.f32 %v1414, 0.0
    %v1503 = vmax.f32 %v1416, 0.0
    %v1504 = vmax.f32 %v1496, 0.0
    %v1505 = vmax.f32 %v1498, 0.0
    %v1506 = vpack.c.bf16 %v1502, %v1502
    %v1507 = vpack.c.bf16 %v1503, %v1503
    %v1508 = vpack.c.bf16 %v1504, %v1504
    %v1509 = vpack.c.bf16 %v1505, %v1505
    %v1510 = vld [vmem:[#allocation8] sm:$0xff]
    %v1511 = vld [vmem:[#allocation8 + $0x8] sm:$0xff]
    %v1512 = vld [vmem:[#allocation8 + $0x10] sm:$0xff]
    %v1513 = vld [vmem:[#allocation8 + $0x18] sm:$0xff]
    %v1514 = vld [vmem:[#allocation8 + $0x20] sm:$0xff]
    %v1515 = vld [vmem:[#allocation8 + $0x28] sm:$0xff]
    %v1516 = vld [vmem:[#allocation8 + $0x30] sm:$0xff]
    %v1517 = vld [vmem:[#allocation8 + $0x38] sm:$0xff]
    %v1518 = vld [vmem:[#allocation8 + $0x40] sm:$0xff]
    %v1519 = vld [vmem:[#allocation8 + $0x48] sm:$0xff]
    %v1520 = vld [vmem:[#allocation8 + $0x50] sm:$0xff]
    %v1521 = vld [vmem:[#allocation8 + $0x58] sm:$0xff]
    %v1522 = vld [vmem:[#allocation8 + $0x60] sm:$0xff]
    %v1523 = vld [vmem:[#allocation8 + $0x68] sm:$0xff]
    %v1524 = vld [vmem:[#allocation8 + $0x70] sm:$0xff]
    %v1525 = vld [vmem:[#allocation8 + $0x78] sm:$0xff]
    %v1526 = vld [vmem:[#allocation8 + $0x80] sm:$0xff]
    %v1527 = vld [vmem:[#allocation8 + $0x88] sm:$0xff]
    %v1528 = vld [vmem:[#allocation8 + $0x90] sm:$0xff]
    %v1529 = vld [vmem:[#allocation8 + $0x98] sm:$0xff]
    %v1530 = vld [vmem:[#allocation8 + $0xa0] sm:$0xff]
    %v1531 = vld [vmem:[#allocation8 + $0xa8] sm:$0xff]
    %v1532 = vld [vmem:[#allocation8 + $0xb0] sm:$0xff]
    %v1533 = vld [vmem:[#allocation8 + $0xb8] sm:$0xff]
    %v1534 = vld [vmem:[#allocation8 + $0xc0] sm:$0xff]
    %v1535 = vld [vmem:[#allocation8 + $0xc8] sm:$0xff]
    %v1536 = vld [vmem:[#allocation8 + $0xd0] sm:$0xff]
    %v1537 = vld [vmem:[#allocation8 + $0xd8] sm:$0xff]
    %v1538 = vld [vmem:[#allocation8 + $0xe0] sm:$0xff]
    %v1539 = vld [vmem:[#allocation8 + $0xe8] sm:$0xff]
    %v1540 = vld [vmem:[#allocation8 + $0xf0] sm:$0xff]
    %v1541 = vld [vmem:[#allocation8 + $0xf8] sm:$0xff]
    %v1542 = vld [vmem:[#allocation8 + $0x100] sm:$0xff]
    %v1543 = vld [vmem:[#allocation8 + $0x108] sm:$0xff]
    %v1544 = vld [vmem:[#allocation8 + $0x110] sm:$0xff]
    %v1545 = vld [vmem:[#allocation8 + $0x118] sm:$0xff]
    %v1546 = vld [vmem:[#allocation8 + $0x120] sm:$0xff]
    %v1547 = vld [vmem:[#allocation8 + $0x128] sm:$0xff]
    %v1548 = vld [vmem:[#allocation8 + $0x130] sm:$0xff]
    %v1549 = vld [vmem:[#allocation8 + $0x138] sm:$0xff]
    %v1550 = vld [vmem:[#allocation8 + $0x140] sm:$0xff]
    %v1551 = vld [vmem:[#allocation8 + $0x148] sm:$0xff]
    %v1552 = vld [vmem:[#allocation8 + $0x150] sm:$0xff]
    %v1553 = vld [vmem:[#allocation8 + $0x158] sm:$0xff]
    %v1554 = vld [vmem:[#allocation8 + $0x160] sm:$0xff]
    %v1555 = vld [vmem:[#allocation8 + $0x168] sm:$0xff]
    %v1556 = vld [vmem:[#allocation8 + $0x170] sm:$0xff]
    %v1557 = vld [vmem:[#allocation8 + $0x178] sm:$0xff]
    %v1558 = vld [vmem:[#allocation8 + $0x180] sm:$0xff]
    %v1559 = vld [vmem:[#allocation8 + $0x188] sm:$0xff]
    %v1560 = vld [vmem:[#allocation8 + $0x190] sm:$0xff]
    %v1561 = vld [vmem:[#allocation8 + $0x198] sm:$0xff]
    %v1562 = vld [vmem:[#allocation8 + $0x1a0] sm:$0xff]
    %v1563 = vld [vmem:[#allocation8 + $0x1a8] sm:$0xff]
    %v1564 = vld [vmem:[#allocation8 + $0x1b0] sm:$0xff]
    %v1565 = vld [vmem:[#allocation8 + $0x1b8] sm:$0xff]
    %v1566 = vld [vmem:[#allocation8 + $0x1c0] sm:$0xff]
    %v1567 = vld [vmem:[#allocation8 + $0x1c8] sm:$0xff]
    %v1568 = vld [vmem:[#allocation8 + $0x1d0] sm:$0xff]
    %v1569 = vld [vmem:[#allocation8 + $0x1d8] sm:$0xff]
    %v1570 = vld [vmem:[#allocation8 + $0x1e0] sm:$0xff]
    %v1571 = vld [vmem:[#allocation8 + $0x1e8] sm:$0xff]
    %v1572 = vld [vmem:[#allocation8 + $0x1f0] sm:$0xff]
    %v1573 = vld [vmem:[#allocation8 + $0x1f8] sm:$0xff]
    %v1574 = vld [vmem:[#allocation8 + $0x200] sm:$0xff]
    %v1575 = vld [vmem:[#allocation8 + $0x208] sm:$0xff]
    %v1576 = vld [vmem:[#allocation8 + $0x210] sm:$0xff]
    %v1577 = vld [vmem:[#allocation8 + $0x218] sm:$0xff]
    %v1578 = vld [vmem:[#allocation8 + $0x220] sm:$0xff]
    %v1579 = vld [vmem:[#allocation8 + $0x228] sm:$0xff]
    %v1580 = vld [vmem:[#allocation8 + $0x230] sm:$0xff]
    %v1581 = vld [vmem:[#allocation8 + $0x238] sm:$0xff]
    %v1582 = vld [vmem:[#allocation8 + $0x240] sm:$0xff]
    %v1583 = vld [vmem:[#allocation8 + $0x248] sm:$0xff]
    %v1584 = vld [vmem:[#allocation8 + $0x250] sm:$0xff]
    %v1585 = vld [vmem:[#allocation8 + $0x258] sm:$0xff]
    %v1586 = vld [vmem:[#allocation8 + $0x260] sm:$0xff]
    %v1587 = vld [vmem:[#allocation8 + $0x268] sm:$0xff]
    %v1588 = vld [vmem:[#allocation8 + $0x270] sm:$0xff]
    %v1589 = vld [vmem:[#allocation8 + $0x278] sm:$0xff]
    %v1590 = vld [vmem:[#allocation8 + $0x280] sm:$0xff]
    %v1591 = vld [vmem:[#allocation8 + $0x288] sm:$0xff]
    %v1592 = vld [vmem:[#allocation8 + $0x290] sm:$0xff]
    %v1593 = vld [vmem:[#allocation8 + $0x298] sm:$0xff]
    %v1594 = vld [vmem:[#allocation8 + $0x2a0] sm:$0xff]
    %v1595 = vld [vmem:[#allocation8 + $0x2a8] sm:$0xff]
    %v1596 = vld [vmem:[#allocation8 + $0x2b0] sm:$0xff]
    %v1597 = vld [vmem:[#allocation8 + $0x2b8] sm:$0xff]
    %v1598 = vld [vmem:[#allocation8 + $0x2c0] sm:$0xff]
    %v1599 = vld [vmem:[#allocation8 + $0x2c8] sm:$0xff]
    %v1600 = vld [vmem:[#allocation8 + $0x2d0] sm:$0xff]
    %v1601 = vld [vmem:[#allocation8 + $0x2d8] sm:$0xff]
    %v1602 = vld [vmem:[#allocation8 + $0x2e0] sm:$0xff]
    %v1603 = vld [vmem:[#allocation8 + $0x2e8] sm:$0xff]
    %v1604 = vld [vmem:[#allocation8 + $0x2f0] sm:$0xff]
    %v1605 = vld [vmem:[#allocation8 + $0x2f8] sm:$0xff]
    %v1606 = vld [vmem:[#allocation8 + $0x300] sm:$0xff]
    %v1607 = vld [vmem:[#allocation8 + $0x308] sm:$0xff]
    %v1608 = vld [vmem:[#allocation8 + $0x310] sm:$0xff]
    %v1609 = vld [vmem:[#allocation8 + $0x318] sm:$0xff]
    %v1610 = vld [vmem:[#allocation8 + $0x320] sm:$0xff]
    %v1611 = vld [vmem:[#allocation8 + $0x328] sm:$0xff]
    %v1612 = vld [vmem:[#allocation8 + $0x330] sm:$0xff]
    %v1613 = vld [vmem:[#allocation8 + $0x338] sm:$0xff]
    %v1614 = vld [vmem:[#allocation8 + $0x340] sm:$0xff]
    %v1615 = vld [vmem:[#allocation8 + $0x348] sm:$0xff]
    %v1616 = vld [vmem:[#allocation8 + $0x350] sm:$0xff]
    %v1617 = vld [vmem:[#allocation8 + $0x358] sm:$0xff]
    %v1618 = vld [vmem:[#allocation8 + $0x360] sm:$0xff]
    %v1619 = vld [vmem:[#allocation8 + $0x368] sm:$0xff]
    %v1620 = vld [vmem:[#allocation8 + $0x370] sm:$0xff]
    %v1621 = vld [vmem:[#allocation8 + $0x378] sm:$0xff]
    %v1622 = vld [vmem:[#allocation8 + $0x380] sm:$0xff]
    %v1623 = vld [vmem:[#allocation8 + $0x388] sm:$0xff]
    %v1624 = vld [vmem:[#allocation8 + $0x390] sm:$0xff]
    %v1625 = vld [vmem:[#allocation8 + $0x398] sm:$0xff]
    %v1626 = vld [vmem:[#allocation8 + $0x3a0] sm:$0xff]
    %v1627 = vld [vmem:[#allocation8 + $0x3a8] sm:$0xff]
    %v1628 = vld [vmem:[#allocation8 + $0x3b0] sm:$0xff]
    %v1629 = vld [vmem:[#allocation8 + $0x3b8] sm:$0xff]
    %v1630 = vld [vmem:[#allocation8 + $0x3c0] sm:$0xff]
    %v1631 = vld [vmem:[#allocation8 + $0x3c8] sm:$0xff]
    %v1632 = vld [vmem:[#allocation8 + $0x3d0] sm:$0xff]
    %v1633 = vld [vmem:[#allocation8 + $0x3d8] sm:$0xff]
    %v1634 = vld [vmem:[#allocation8 + $0x3e0] sm:$0xff]
    %v1635 = vld [vmem:[#allocation8 + $0x3e8] sm:$0xff]
    %v1636 = vld [vmem:[#allocation8 + $0x3f0] sm:$0xff]
    %v1637 = vld [vmem:[#allocation8 + $0x3f8] sm:$0xff]
    %v1638 = vld [vmem:[%s6] sm:$0xf]
    %v1640 = vlaneseq
    %v1641 = vshrl.u32 %v1640, 7
    %v1642 = vsub.s32 0, %v1641
    %v1643 = vrot.slane %v1638, %v1642
    %v1644 = vlaneseq
    %v1645 = vshrl.u32 %v1644, 7
    %v1646 = vsub.s32 1, %v1645
    %v1647 = vrot.slane %v1638, %v1646
    %v1648 = vlaneseq
    %v1649 = vshrl.u32 %v1648, 7
    %v1650 = vsub.s32 2, %v1649
    %v1651 = vrot.slane %v1638, %v1650
    %v1652 = vlaneseq
    %v1653 = vshrl.u32 %v1652, 7
    %v1654 = vsub.s32 3, %v1653
    %v1655 = vrot.slane %v1638, %v1654
    %v1788 = vunpack.c.l.b16 %v1510
    %v1789 = vunpack.c.h.b16 %v1510
    %v1790 = vunpack.c.l.b16 %v1511
    %v1791 = vunpack.c.h.b16 %v1511
    %v1792 = vunpack.c.l.b16 %v1512
    %v1793 = vunpack.c.h.b16 %v1512
    %v1794 = vunpack.c.l.b16 %v1513
    %v1795 = vunpack.c.h.b16 %v1513
    %v1796 = vunpack.c.l.b16 %v1514
    %v1797 = vunpack.c.h.b16 %v1514
    %v1798 = vunpack.c.l.b16 %v1515
    %v1799 = vunpack.c.h.b16 %v1515
    %v1800 = vunpack.c.l.b16 %v1516
    %v1801 = vunpack.c.h.b16 %v1516
    %v1802 = vunpack.c.l.b16 %v1517
    %v1803 = vunpack.c.h.b16 %v1517
    %v1804 = vunpack.c.l.b16 %v1518
    %v1805 = vunpack.c.h.b16 %v1518
    %v1806 = vunpack.c.l.b16 %v1519
    %v1807 = vunpack.c.h.b16 %v1519
    %v1808 = vunpack.c.l.b16 %v1520
    %v1809 = vunpack.c.h.b16 %v1520
    %v1810 = vunpack.c.l.b16 %v1521
    %v1811 = vunpack.c.h.b16 %v1521
    %v1812 = vunpack.c.l.b16 %v1522
    %v1813 = vunpack.c.h.b16 %v1522
    %v1814 = vunpack.c.l.b16 %v1523
    %v1815 = vunpack.c.h.b16 %v1523
    %v1816 = vunpack.c.l.b16 %v1524
    %v1817 = vunpack.c.h.b16 %v1524
    %v1818 = vunpack.c.l.b16 %v1525
    %v1819 = vunpack.c.h.b16 %v1525
    %v1820 = vunpack.c.l.b16 %v1526
    %v1821 = vunpack.c.h.b16 %v1526
    %v1822 = vunpack.c.l.b16 %v1527
    %v1823 = vunpack.c.h.b16 %v1527
    %v1824 = vunpack.c.l.b16 %v1528
    %v1825 = vunpack.c.h.b16 %v1528
    %v1826 = vunpack.c.l.b16 %v1529
    %v1827 = vunpack.c.h.b16 %v1529
    %v1828 = vunpack.c.l.b16 %v1530
    %v1829 = vunpack.c.h.b16 %v1530
    %v1830 = vunpack.c.l.b16 %v1531
    %v1831 = vunpack.c.h.b16 %v1531
    %v1832 = vunpack.c.l.b16 %v1532
    %v1833 = vunpack.c.h.b16 %v1532
    %v1834 = vunpack.c.l.b16 %v1533
    %v1835 = vunpack.c.h.b16 %v1533
    %v1836 = vunpack.c.l.b16 %v1534
    %v1837 = vunpack.c.h.b16 %v1534
    %v1838 = vunpack.c.l.b16 %v1535
    %v1839 = vunpack.c.h.b16 %v1535
    %v1840 = vunpack.c.l.b16 %v1536
    %v1841 = vunpack.c.h.b16 %v1536
    %v1842 = vunpack.c.l.b16 %v1537
    %v1843 = vunpack.c.h.b16 %v1537
    %v1844 = vunpack.c.l.b16 %v1538
    %v1845 = vunpack.c.h.b16 %v1538
    %v1846 = vunpack.c.l.b16 %v1539
    %v1847 = vunpack.c.h.b16 %v1539
    %v1848 = vunpack.c.l.b16 %v1540
    %v1849 = vunpack.c.h.b16 %v1540
    %v1850 = vunpack.c.l.b16 %v1541
    %v1851 = vunpack.c.h.b16 %v1541
    %v1852 = vunpack.c.l.b16 %v1542
    %v1853 = vunpack.c.h.b16 %v1542
    %v1854 = vunpack.c.l.b16 %v1543
    %v1855 = vunpack.c.h.b16 %v1543
    %v1856 = vunpack.c.l.b16 %v1544
    %v1857 = vunpack.c.h.b16 %v1544
    %v1858 = vunpack.c.l.b16 %v1545
    %v1859 = vunpack.c.h.b16 %v1545
    %v1860 = vunpack.c.l.b16 %v1546
    %v1861 = vunpack.c.h.b16 %v1546
    %v1862 = vunpack.c.l.b16 %v1547
    %v1863 = vunpack.c.h.b16 %v1547
    %v1864 = vunpack.c.l.b16 %v1548
    %v1865 = vunpack.c.h.b16 %v1548
    %v1866 = vunpack.c.l.b16 %v1549
    %v1867 = vunpack.c.h.b16 %v1549
    %v1868 = vunpack.c.l.b16 %v1550
    %v1869 = vunpack.c.h.b16 %v1550
    %v1870 = vunpack.c.l.b16 %v1551
    %v1871 = vunpack.c.h.b16 %v1551
    %v1872 = vunpack.c.l.b16 %v1552
    %v1873 = vunpack.c.h.b16 %v1552
    %v1874 = vunpack.c.l.b16 %v1553
    %v1875 = vunpack.c.h.b16 %v1553
    %v1876 = vunpack.c.l.b16 %v1554
    %v1877 = vunpack.c.h.b16 %v1554
    %v1878 = vunpack.c.l.b16 %v1555
    %v1879 = vunpack.c.h.b16 %v1555
    %v1880 = vunpack.c.l.b16 %v1556
    %v1881 = vunpack.c.h.b16 %v1556
    %v1882 = vunpack.c.l.b16 %v1557
    %v1883 = vunpack.c.h.b16 %v1557
    %v1884 = vunpack.c.l.b16 %v1558
    %v1885 = vunpack.c.h.b16 %v1558
    %v1886 = vunpack.c.l.b16 %v1559
    %v1887 = vunpack.c.h.b16 %v1559
    %v1888 = vunpack.c.l.b16 %v1560
    %v1889 = vunpack.c.h.b16 %v1560
    %v1890 = vunpack.c.l.b16 %v1561
    %v1891 = vunpack.c.h.b16 %v1561
    %v1892 = vunpack.c.l.b16 %v1562
    %v1893 = vunpack.c.h.b16 %v1562
    %v1894 = vunpack.c.l.b16 %v1563
    %v1895 = vunpack.c.h.b16 %v1563
    %v1896 = vunpack.c.l.b16 %v1564
    %v1897 = vunpack.c.h.b16 %v1564
    %v1898 = vunpack.c.l.b16 %v1565
    %v1899 = vunpack.c.h.b16 %v1565
    %v1900 = vunpack.c.l.b16 %v1566
    %v1901 = vunpack.c.h.b16 %v1566
    %v1902 = vunpack.c.l.b16 %v1567
    %v1903 = vunpack.c.h.b16 %v1567
    %v1904 = vunpack.c.l.b16 %v1568
    %v1905 = vunpack.c.h.b16 %v1568
    %v1906 = vunpack.c.l.b16 %v1569
    %v1907 = vunpack.c.h.b16 %v1569
    %v1908 = vunpack.c.l.b16 %v1570
    %v1909 = vunpack.c.h.b16 %v1570
    %v1910 = vunpack.c.l.b16 %v1571
    %v1911 = vunpack.c.h.b16 %v1571
    %v1912 = vunpack.c.l.b16 %v1572
    %v1913 = vunpack.c.h.b16 %v1572
    %v1914 = vunpack.c.l.b16 %v1573
    %v1915 = vunpack.c.h.b16 %v1573
    %v1916 = vunpack.c.l.b16 %v1574
    %v1917 = vunpack.c.h.b16 %v1574
    %v1918 = vunpack.c.l.b16 %v1575
    %v1919 = vunpack.c.h.b16 %v1575
    %v1920 = vunpack.c.l.b16 %v1576
    %v1921 = vunpack.c.h.b16 %v1576
    %v1922 = vunpack.c.l.b16 %v1577
    %v1923 = vunpack.c.h.b16 %v1577
    %v1924 = vunpack.c.l.b16 %v1578
    %v1925 = vunpack.c.h.b16 %v1578
    %v1926 = vunpack.c.l.b16 %v1579
    %v1927 = vunpack.c.h.b16 %v1579
    %v1928 = vunpack.c.l.b16 %v1580
    %v1929 = vunpack.c.h.b16 %v1580
    %v1930 = vunpack.c.l.b16 %v1581
    %v1931 = vunpack.c.h.b16 %v1581
    %v1932 = vunpack.c.l.b16 %v1582
    %v1933 = vunpack.c.h.b16 %v1582
    %v1934 = vunpack.c.l.b16 %v1583
    %v1935 = vunpack.c.h.b16 %v1583
    %v1936 = vunpack.c.l.b16 %v1584
    %v1937 = vunpack.c.h.b16 %v1584
    %v1938 = vunpack.c.l.b16 %v1585
    %v1939 = vunpack.c.h.b16 %v1585
    %v1940 = vunpack.c.l.b16 %v1586
    %v1941 = vunpack.c.h.b16 %v1586
    %v1942 = vunpack.c.l.b16 %v1587
    %v1943 = vunpack.c.h.b16 %v1587
    %v1944 = vunpack.c.l.b16 %v1588
    %v1945 = vunpack.c.h.b16 %v1588
    %v1946 = vunpack.c.l.b16 %v1589
    %v1947 = vunpack.c.h.b16 %v1589
    %v1948 = vunpack.c.l.b16 %v1590
    %v1949 = vunpack.c.h.b16 %v1590
    %v1950 = vunpack.c.l.b16 %v1591
    %v1951 = vunpack.c.h.b16 %v1591
    %v1952 = vunpack.c.l.b16 %v1592
    %v1953 = vunpack.c.h.b16 %v1592
    %v1954 = vunpack.c.l.b16 %v1593
    %v1955 = vunpack.c.h.b16 %v1593
    %v1956 = vunpack.c.l.b16 %v1594
    %v1957 = vunpack.c.h.b16 %v1594
    %v1958 = vunpack.c.l.b16 %v1595
    %v1959 = vunpack.c.h.b16 %v1595
    %v1960 = vunpack.c.l.b16 %v1596
    %v1961 = vunpack.c.h.b16 %v1596
    %v1962 = vunpack.c.l.b16 %v1597
    %v1963 = vunpack.c.h.b16 %v1597
    %v1964 = vunpack.c.l.b16 %v1598
    %v1965 = vunpack.c.h.b16 %v1598
    %v1966 = vunpack.c.l.b16 %v1599
    %v1967 = vunpack.c.h.b16 %v1599
    %v1968 = vunpack.c.l.b16 %v1600
    %v1969 = vunpack.c.h.b16 %v1600
    %v1970 = vunpack.c.l.b16 %v1601
    %v1971 = vunpack.c.h.b16 %v1601
    %v1972 = vunpack.c.l.b16 %v1602
    %v1973 = vunpack.c.h.b16 %v1602
    %v1974 = vunpack.c.l.b16 %v1603
    %v1975 = vunpack.c.h.b16 %v1603
    %v1976 = vunpack.c.l.b16 %v1604
    %v1977 = vunpack.c.h.b16 %v1604
    %v1978 = vunpack.c.l.b16 %v1605
    %v1979 = vunpack.c.h.b16 %v1605
    %v1980 = vunpack.c.l.b16 %v1606
    %v1981 = vunpack.c.h.b16 %v1606
    %v1982 = vunpack.c.l.b16 %v1607
    %v1983 = vunpack.c.h.b16 %v1607
    %v1984 = vunpack.c.l.b16 %v1608
    %v1985 = vunpack.c.h.b16 %v1608
    %v1986 = vunpack.c.l.b16 %v1609
    %v1987 = vunpack.c.h.b16 %v1609
    %v1988 = vunpack.c.l.b16 %v1610
    %v1989 = vunpack.c.h.b16 %v1610
    %v1990 = vunpack.c.l.b16 %v1611
    %v1991 = vunpack.c.h.b16 %v1611
    %v1992 = vunpack.c.l.b16 %v1612
    %v1993 = vunpack.c.h.b16 %v1612
    %v1994 = vunpack.c.l.b16 %v1613
    %v1995 = vunpack.c.h.b16 %v1613
    %v1996 = vunpack.c.l.b16 %v1614
    %v1997 = vunpack.c.h.b16 %v1614
    %v1998 = vunpack.c.l.b16 %v1615
    %v1999 = vunpack.c.h.b16 %v1615
    %v2000 = vunpack.c.l.b16 %v1616
    %v2001 = vunpack.c.h.b16 %v1616
    %v2002 = vunpack.c.l.b16 %v1617
    %v2003 = vunpack.c.h.b16 %v1617
    %v2004 = vunpack.c.l.b16 %v1618
    %v2005 = vunpack.c.h.b16 %v1618
    %v2006 = vunpack.c.l.b16 %v1619
    %v2007 = vunpack.c.h.b16 %v1619
    %v2008 = vunpack.c.l.b16 %v1620
    %v2009 = vunpack.c.h.b16 %v1620
    %v2010 = vunpack.c.l.b16 %v1621
    %v2011 = vunpack.c.h.b16 %v1621
    %v2012 = vunpack.c.l.b16 %v1622
    %v2013 = vunpack.c.h.b16 %v1622
    %v2014 = vunpack.c.l.b16 %v1623
    %v2015 = vunpack.c.h.b16 %v1623
    %v2016 = vunpack.c.l.b16 %v1624
    %v2017 = vunpack.c.h.b16 %v1624
    %v2018 = vunpack.c.l.b16 %v1625
    %v2019 = vunpack.c.h.b16 %v1625
    %v2020 = vunpack.c.l.b16 %v1626
    %v2021 = vunpack.c.h.b16 %v1626
    %v2022 = vunpack.c.l.b16 %v1627
    %v2023 = vunpack.c.h.b16 %v1627
    %v2024 = vunpack.c.l.b16 %v1628
    %v2025 = vunpack.c.h.b16 %v1628
    %v2026 = vunpack.c.l.b16 %v1629
    %v2027 = vunpack.c.h.b16 %v1629
    %v2028 = vunpack.c.l.b16 %v1630
    %v2029 = vunpack.c.h.b16 %v1630
    %v2030 = vunpack.c.l.b16 %v1631
    %v2031 = vunpack.c.h.b16 %v1631
    %v2032 = vunpack.c.l.b16 %v1632
    %v2033 = vunpack.c.h.b16 %v1632
    %v2034 = vunpack.c.l.b16 %v1633
    %v2035 = vunpack.c.h.b16 %v1633
    %v2036 = vunpack.c.l.b16 %v1634
    %v2037 = vunpack.c.h.b16 %v1634
    %v2038 = vunpack.c.l.b16 %v1635
    %v2039 = vunpack.c.h.b16 %v1635
    %v2040 = vunpack.c.l.b16 %v1636
    %v2041 = vunpack.c.h.b16 %v1636
    %v2042 = vunpack.c.l.b16 %v1637
    %v2043 = vunpack.c.h.b16 %v1637
    %v2044 = vpack.c.b16 %v1792, %v1788
    %v2045 = vpack.c.b16 %v1793, %v1789
    %v2046 = vpack.c.b16 %v1794, %v1790
    %v2047 = vpack.c.b16 %v1795, %v1791
    %v2048 = vpack.c.b16 %v1800, %v1796
    %v2049 = vpack.c.b16 %v1801, %v1797
    %v2050 = vpack.c.b16 %v1802, %v1798
    %v2051 = vpack.c.b16 %v1803, %v1799
    %v2052 = vpack.c.b16 %v1808, %v1804
    %v2053 = vpack.c.b16 %v1809, %v1805
    %v2054 = vpack.c.b16 %v1810, %v1806
    %v2055 = vpack.c.b16 %v1811, %v1807
    %v2056 = vpack.c.b16 %v1816, %v1812
    %v2057 = vpack.c.b16 %v1817, %v1813
    %v2058 = vpack.c.b16 %v1818, %v1814
    %v2059 = vpack.c.b16 %v1819, %v1815
    %v2060 = vpack.c.b16 %v1824, %v1820
    %v2061 = vpack.c.b16 %v1825, %v1821
    %v2062 = vpack.c.b16 %v1826, %v1822
    %v2063 = vpack.c.b16 %v1827, %v1823
    %v2064 = vpack.c.b16 %v1832, %v1828
    %v2065 = vpack.c.b16 %v1833, %v1829
    %v2066 = vpack.c.b16 %v1834, %v1830
    %v2067 = vpack.c.b16 %v1835, %v1831
    %v2068 = vpack.c.b16 %v1840, %v1836
    %v2069 = vpack.c.b16 %v1841, %v1837
    %v2070 = vpack.c.b16 %v1842, %v1838
    %v2071 = vpack.c.b16 %v1843, %v1839
    %v2072 = vpack.c.b16 %v1848, %v1844
    %v2073 = vpack.c.b16 %v1849, %v1845
    %v2074 = vpack.c.b16 %v1850, %v1846
    %v2075 = vpack.c.b16 %v1851, %v1847
    %v2076 = vpack.c.b16 %v1856, %v1852
    %v2077 = vpack.c.b16 %v1857, %v1853
    %v2078 = vpack.c.b16 %v1858, %v1854
    %v2079 = vpack.c.b16 %v1859, %v1855
    %v2080 = vpack.c.b16 %v1864, %v1860
    %v2081 = vpack.c.b16 %v1865, %v1861
    %v2082 = vpack.c.b16 %v1866, %v1862
    %v2083 = vpack.c.b16 %v1867, %v1863
    %v2084 = vpack.c.b16 %v1872, %v1868
    %v2085 = vpack.c.b16 %v1873, %v1869
    %v2086 = vpack.c.b16 %v1874, %v1870
    %v2087 = vpack.c.b16 %v1875, %v1871
    %v2088 = vpack.c.b16 %v1880, %v1876
    %v2089 = vpack.c.b16 %v1881, %v1877
    %v2090 = vpack.c.b16 %v1882, %v1878
    %v2091 = vpack.c.b16 %v1883, %v1879
    %v2092 = vpack.c.b16 %v1888, %v1884
    %v2093 = vpack.c.b16 %v1889, %v1885
    %v2094 = vpack.c.b16 %v1890, %v1886
    %v2095 = vpack.c.b16 %v1891, %v1887
    %v2096 = vpack.c.b16 %v1896, %v1892
    %v2097 = vpack.c.b16 %v1897, %v1893
    %v2098 = vpack.c.b16 %v1898, %v1894
    %v2099 = vpack.c.b16 %v1899, %v1895
    %v2100 = vpack.c.b16 %v1904, %v1900
    %v2101 = vpack.c.b16 %v1905, %v1901
    %v2102 = vpack.c.b16 %v1906, %v1902
    %v2103 = vpack.c.b16 %v1907, %v1903
    %v2104 = vpack.c.b16 %v1912, %v1908
    %v2105 = vpack.c.b16 %v1913, %v1909
    %v2106 = vpack.c.b16 %v1914, %v1910
    %v2107 = vpack.c.b16 %v1915, %v1911
    %v2108 = vpack.c.b16 %v1920, %v1916
    %v2109 = vpack.c.b16 %v1921, %v1917
    %v2110 = vpack.c.b16 %v1922, %v1918
    %v2111 = vpack.c.b16 %v1923, %v1919
    %v2112 = vpack.c.b16 %v1928, %v1924
    %v2113 = vpack.c.b16 %v1929, %v1925
    %v2114 = vpack.c.b16 %v1930, %v1926
    %v2115 = vpack.c.b16 %v1931, %v1927
    %v2116 = vpack.c.b16 %v1936, %v1932
    %v2117 = vpack.c.b16 %v1937, %v1933
    %v2118 = vpack.c.b16 %v1938, %v1934
    %v2119 = vpack.c.b16 %v1939, %v1935
    %v2120 = vpack.c.b16 %v1944, %v1940
    %v2121 = vpack.c.b16 %v1945, %v1941
    %v2122 = vpack.c.b16 %v1946, %v1942
    %v2123 = vpack.c.b16 %v1947, %v1943
    %v2124 = vpack.c.b16 %v1952, %v1948
    %v2125 = vpack.c.b16 %v1953, %v1949
    %v2126 = vpack.c.b16 %v1954, %v1950
    %v2127 = vpack.c.b16 %v1955, %v1951
    %v2128 = vpack.c.b16 %v1960, %v1956
    %v2129 = vpack.c.b16 %v1961, %v1957
    %v2130 = vpack.c.b16 %v1962, %v1958
    %v2131 = vpack.c.b16 %v1963, %v1959
    %v2132 = vpack.c.b16 %v1968, %v1964
    %v2133 = vpack.c.b16 %v1969, %v1965
    %v2134 = vpack.c.b16 %v1970, %v1966
    %v2135 = vpack.c.b16 %v1971, %v1967
    %v2136 = vpack.c.b16 %v1976, %v1972
    %v2137 = vpack.c.b16 %v1977, %v1973
    %v2138 = vpack.c.b16 %v1978, %v1974
    %v2139 = vpack.c.b16 %v1979, %v1975
    %v2140 = vpack.c.b16 %v1984, %v1980
    %v2141 = vpack.c.b16 %v1985, %v1981
    %v2142 = vpack.c.b16 %v1986, %v1982
    %v2143 = vpack.c.b16 %v1987, %v1983
    %v2144 = vpack.c.b16 %v1992, %v1988
    %v2145 = vpack.c.b16 %v1993, %v1989
    %v2146 = vpack.c.b16 %v1994, %v1990
    %v2147 = vpack.c.b16 %v1995, %v1991
    %v2148 = vpack.c.b16 %v2000, %v1996
    %v2149 = vpack.c.b16 %v2001, %v1997
    %v2150 = vpack.c.b16 %v2002, %v1998
    %v2151 = vpack.c.b16 %v2003, %v1999
    %v2152 = vpack.c.b16 %v2008, %v2004
    %v2153 = vpack.c.b16 %v2009, %v2005
    %v2154 = vpack.c.b16 %v2010, %v2006
    %v2155 = vpack.c.b16 %v2011, %v2007
    %v2156 = vpack.c.b16 %v2016, %v2012
    %v2157 = vpack.c.b16 %v2017, %v2013
    %v2158 = vpack.c.b16 %v2018, %v2014
    %v2159 = vpack.c.b16 %v2019, %v2015
    %v2160 = vpack.c.b16 %v2024, %v2020
    %v2161 = vpack.c.b16 %v2025, %v2021
    %v2162 = vpack.c.b16 %v2026, %v2022
    %v2163 = vpack.c.b16 %v2027, %v2023
    %v2164 = vpack.c.b16 %v2032, %v2028
    %v2165 = vpack.c.b16 %v2033, %v2029
    %v2166 = vpack.c.b16 %v2034, %v2030
    %v2167 = vpack.c.b16 %v2035, %v2031
    %v2168 = vpack.c.b16 %v2040, %v2036
    %v2169 = vpack.c.b16 %v2041, %v2037
    %v2170 = vpack.c.b16 %v2042, %v2038
    %v2171 = vpack.c.b16 %v2043, %v2039
    %2300 = vmatprep.subr.bf16.mxu0 %v2045
    %2301 = vmatpush1.bf16.msra.mxu0 %v2044
    %2302 = vmatprep.subr.bf16.mxu0 %v2049
    %2303 = vmatpush1.bf16.msra.mxu0 %v2048
    %2304 = vmatprep.subr.bf16.mxu0 %v2053
    %2305 = vmatpush1.bf16.msra.mxu0 %v2052
    %2306 = vmatprep.subr.bf16.mxu0 %v2057
    %2307 = vmatpush1.bf16.msra.mxu0 %v2056
    %2308 = vmatprep.subr.bf16.mxu0 %v2061
    %2309 = vmatpush1.bf16.msra.mxu0 %v2060
    %2310 = vmatprep.subr.bf16.mxu0 %v2065
    %2311 = vmatpush1.bf16.msra.mxu0 %v2064
    %2312 = vmatprep.subr.bf16.mxu0 %v2069
    %2313 = vmatpush1.bf16.msra.mxu0 %v2068
    %2314 = vmatprep.subr.bf16.mxu0 %v2073
    %2315 = vmatpush1.bf16.msra.mxu0 %v2072
    %2316 = vmatprep.subr.bf16.mxu0 %v2077
    %2317 = vmatpush1.bf16.msra.mxu0 %v2076
    %2318 = vmatprep.subr.bf16.mxu0 %v2081
    %2319 = vmatpush1.bf16.msra.mxu0 %v2080
    %2320 = vmatprep.subr.bf16.mxu0 %v2085
    %2321 = vmatpush1.bf16.msra.mxu0 %v2084
    %2322 = vmatprep.subr.bf16.mxu0 %v2089
    %2323 = vmatpush1.bf16.msra.mxu0 %v2088
    %2324 = vmatprep.subr.bf16.mxu0 %v2093
    %2325 = vmatpush1.bf16.msra.mxu0 %v2092
    %2326 = vmatprep.subr.bf16.mxu0 %v2097
    %2327 = vmatpush1.bf16.msra.mxu0 %v2096
    %2328 = vmatprep.subr.bf16.mxu0 %v2101
    %2329 = vmatpush1.bf16.msra.mxu0 %v2100
    %2330 = vmatprep.subr.bf16.mxu0 %v2105
    %2331 = vmatpush1.bf16.msra.mxu0 %v2104
    %2332 = vmatprep.mubr.bf16.mxu0 %v1507
    %2333 = vmatmul.mubr.bf16.gmra.mrb[0].mxu0 %v1506
    %v2334 = vpop.f32.mrb[0].mxu0
    %v2335 = vadd.f32 %v1643, %v2334
    %v2336 = vpop.f32.mrb[0].mxu0
    %v2337 = vadd.f32 %v1647, %v2336
    %v2338 = vpop.f32.mrb[0].mxu0
    %v2339 = vpop.f32.mrb[0].mxu0
    %2340 = vdwg.mxu0
    %2341 = vmatprep.subr.bf16.mxu0 %v2109
    %2342 = vmatpush1.bf16.msra.mxu0 %v2108
    %2343 = vmatprep.subr.bf16.mxu0 %v2113
    %2344 = vmatpush1.bf16.msra.mxu0 %v2112
    %2345 = vmatprep.subr.bf16.mxu0 %v2117
    %2346 = vmatpush1.bf16.msra.mxu0 %v2116
    %2347 = vmatprep.subr.bf16.mxu0 %v2121
    %2348 = vmatpush1.bf16.msra.mxu0 %v2120
    %2349 = vmatprep.subr.bf16.mxu0 %v2125
    %2350 = vmatpush1.bf16.msra.mxu0 %v2124
    %2351 = vmatprep.subr.bf16.mxu0 %v2129
    %2352 = vmatpush1.bf16.msra.mxu0 %v2128
    %2353 = vmatprep.subr.bf16.mxu0 %v2133
    %2354 = vmatpush1.bf16.msra.mxu0 %v2132
    %2355 = vmatprep.subr.bf16.mxu0 %v2137
    %2356 = vmatpush1.bf16.msra.mxu0 %v2136
    %2357 = vmatprep.subr.bf16.mxu0 %v2141
    %2358 = vmatpush1.bf16.msra.mxu0 %v2140
    %2359 = vmatprep.subr.bf16.mxu0 %v2145
    %2360 = vmatpush1.bf16.msra.mxu0 %v2144
    %2361 = vmatprep.subr.bf16.mxu0 %v2149
    %2362 = vmatpush1.bf16.msra.mxu0 %v2148
    %2363 = vmatprep.subr.bf16.mxu0 %v2153
    %2364 = vmatpush1.bf16.msra.mxu0 %v2152
    %2365 = vmatprep.subr.bf16.mxu0 %v2157
    %2366 = vmatpush1.bf16.msra.mxu0 %v2156
    %2367 = vmatprep.subr.bf16.mxu0 %v2161
    %2368 = vmatpush1.bf16.msra.mxu0 %v2160
    %2369 = vmatprep.subr.bf16.mxu0 %v2165
    %2370 = vmatpush1.bf16.msra.mxu0 %v2164
    %2371 = vmatprep.subr.bf16.mxu0 %v2169
    %2372 = vmatpush1.bf16.msra.mxu0 %v2168
    %2373 = vmatprep.mubr.bf16.mxu0 %v1509
    %2374 = vmatmul.mubr.bf16.gmra.mrb[0].mxu0 %v1508
    %v2375 = vpop.f32.mrb[0].mxu0
    %v2376 = vadd.f32 %v2335, %v2375
    %v2377 = vpop.f32.mrb[0].mxu0
    %v2378 = vadd.f32 %v2337, %v2377
    %v2379 = vpop.f32.mrb[0].mxu0
    %v2380 = vpop.f32.mrb[0].mxu0
    %2381 = vdwg.mxu0
    %2382 = vmatprep.subr.bf16.mxu0 %v2047
    %2383 = vmatpush1.bf16.msra.mxu0 %v2046
    %2384 = vmatprep.subr.bf16.mxu0 %v2051
    %2385 = vmatpush1.bf16.msra.mxu0 %v2050
    %2386 = vmatprep.subr.bf16.mxu0 %v2055
    %2387 = vmatpush1.bf16.msra.mxu0 %v2054
    %2388 = vmatprep.subr.bf16.mxu0 %v2059
    %2389 = vmatpush1.bf16.msra.mxu0 %v2058
    %2390 = vmatprep.subr.bf16.mxu0 %v2063
    %2391 = vmatpush1.bf16.msra.mxu0 %v2062
    %2392 = vmatprep.subr.bf16.mxu0 %v2067
    %2393 = vmatpush1.bf16.msra.mxu0 %v2066
    %2394 = vmatprep.subr.bf16.mxu0 %v2071
    %2395 = vmatpush1.bf16.msra.mxu0 %v2070
    %2396 = vmatprep.subr.bf16.mxu0 %v2075
    %2397 = vmatpush1.bf16.msra.mxu0 %v2074
    %2398 = vmatprep.subr.bf16.mxu0 %v2079
    %2399 = vmatpush1.bf16.msra.mxu0 %v2078
    %2400 = vmatprep.subr.bf16.mxu0 %v2083
    %2401 = vmatpush1.bf16.msra.mxu0 %v2082
    %2402 = vmatprep.subr.bf16.mxu0 %v2087
    %2403 = vmatpush1.bf16.msra.mxu0 %v2086
    %2404 = vmatprep.subr.bf16.mxu0 %v2091
    %2405 = vmatpush1.bf16.msra.mxu0 %v2090
    %2406 = vmatprep.subr.bf16.mxu0 %v2095
    %2407 = vmatpush1.bf16.msra.mxu0 %v2094
    %2408 = vmatprep.subr.bf16.mxu0 %v2099
    %2409 = vmatpush1.bf16.msra.mxu0 %v2098
    %2410 = vmatprep.subr.bf16.mxu0 %v2103
    %2411 = vmatpush1.bf16.msra.mxu0 %v2102
    %2412 = vmatprep.subr.bf16.mxu0 %v2107
    %2413 = vmatpush1.bf16.msra.mxu0 %v2106
    %2414 = vmatprep.mubr.bf16.mxu0 %v1507
    %2415 = vmatmul.mubr.bf16.gmra.mrb[0].mxu0 %v1506
    %v2416 = vpop.f32.mrb[0].mxu0
    %v2417 = vadd.f32 %v1651, %v2416
    %v2418 = vpop.f32.mrb[0].mxu0
    %v2419 = vadd.f32 %v1655, %v2418
    %v2420 = vpop.f32.mrb[0].mxu0
    %v2421 = vpop.f32.mrb[0].mxu0
    %2422 = vdwg.mxu0
    %2423 = vmatprep.subr.bf16.mxu0 %v2111
    %2424 = vmatpush1.bf16.msra.mxu0 %v2110
    %2425 = vmatprep.subr.bf16.mxu0 %v2115
    %2426 = vmatpush1.bf16.msra.mxu0 %v2114
    %2427 = vmatprep.subr.bf16.mxu0 %v2119
    %2428 = vmatpush1.bf16.msra.mxu0 %v2118
    %2429 = vmatprep.subr.bf16.mxu0 %v2123
    %2430 = vmatpush1.bf16.msra.mxu0 %v2122
    %2431 = vmatprep.subr.bf16.mxu0 %v2127
    %2432 = vmatpush1.bf16.msra.mxu0 %v2126
    %2433 = vmatprep.subr.bf16.mxu0 %v2131
    %2434 = vmatpush1.bf16.msra.mxu0 %v2130
    %2435 = vmatprep.subr.bf16.mxu0 %v2135
    %2436 = vmatpush1.bf16.msra.mxu0 %v2134
    %2437 = vmatprep.subr.bf16.mxu0 %v2139
    %2438 = vmatpush1.bf16.msra.mxu0 %v2138
    %2439 = vmatprep.subr.bf16.mxu0 %v2143
    %2440 = vmatpush1.bf16.msra.mxu0 %v2142
    %2441 = vmatprep.subr.bf16.mxu0 %v2147
    %2442 = vmatpush1.bf16.msra.mxu0 %v2146
    %2443 = vmatprep.subr.bf16.mxu0 %v2151
    %2444 = vmatpush1.bf16.msra.mxu0 %v2150
    %2445 = vmatprep.subr.bf16.mxu0 %v2155
    %2446 = vmatpush1.bf16.msra.mxu0 %v2154
    %2447 = vmatprep.subr.bf16.mxu0 %v2159
    %2448 = vmatpush1.bf16.msra.mxu0 %v2158
    %2449 = vmatprep.subr.bf16.mxu0 %v2163
    %2450 = vmatpush1.bf16.msra.mxu0 %v2162
    %2451 = vmatprep.subr.bf16.mxu0 %v2167
    %2452 = vmatpush1.bf16.msra.mxu0 %v2166
    %2453 = vmatprep.subr.bf16.mxu0 %v2171
    %2454 = vmatpush1.bf16.msra.mxu0 %v2170
    %2455 = vmatprep.mubr.bf16.mxu0 %v1509
    %2456 = vmatmul.mubr.bf16.gmra.mrb[0].mxu0 %v1508
    %v2457 = vpop.f32.mrb[0].mxu0
    %v2458 = vadd.f32 %v2417, %v2457
    %v2459 = vpop.f32.mrb[0].mxu0
    %v2460 = vadd.f32 %v2419, %v2459
    %v2461 = vpop.f32.mrb[0].mxu0
    %v2462 = vpop.f32.mrb[0].mxu0
    %2463 = vdwg.mxu0
    %v2464 = vmax.f32 %v2376, 0.0
    %v2465 = vmax.f32 %v2378, 0.0
    %v2466 = vmax.f32 %v2458, 0.0
    %v2467 = vmax.f32 %v2460, 0.0
    %v2468 = vpack.c.bf16 %v2464, %v2464
    %v2469 = vpack.c.bf16 %v2465, %v2465
    %v2470 = vpack.c.bf16 %v2466, %v2466
    %v2471 = vpack.c.bf16 %v2467, %v2467
    %v2472 = vld [vmem:[#allocation10] sm:$0xf]
    %v2473 = vld [vmem:[#allocation10 + $0x4] sm:$0xf]
    %v2474 = vld [vmem:[#allocation10 + $0x8] sm:$0xf]
    %v2475 = vld [vmem:[#allocation10 + $0xc] sm:$0xf]
    %v2476 = vld [vmem:[#allocation10 + $0x10] sm:$0xf]
    %v2477 = vld [vmem:[#allocation10 + $0x14] sm:$0xf]
    %v2478 = vld [vmem:[#allocation10 + $0x18] sm:$0xf]
    %v2479 = vld [vmem:[#allocation10 + $0x1c] sm:$0xf]
    %v2480 = vld [vmem:[#allocation10 + $0x20] sm:$0xf]
    %v2481 = vld [vmem:[#allocation10 + $0x24] sm:$0xf]
    %v2482 = vld [vmem:[#allocation10 + $0x28] sm:$0xf]
    %v2483 = vld [vmem:[#allocation10 + $0x2c] sm:$0xf]
    %v2484 = vld [vmem:[#allocation10 + $0x30] sm:$0xf]
    %v2485 = vld [vmem:[#allocation10 + $0x34] sm:$0xf]
    %v2486 = vld [vmem:[#allocation10 + $0x38] sm:$0xf]
    %v2487 = vld [vmem:[#allocation10 + $0x3c] sm:$0xf]
    %v2488 = vld [vmem:[#allocation10 + $0x40] sm:$0xf]
    %v2489 = vld [vmem:[#allocation10 + $0x44] sm:$0xf]
    %v2490 = vld [vmem:[#allocation10 + $0x48] sm:$0xf]
    %v2491 = vld [vmem:[#allocation10 + $0x4c] sm:$0xf]
    %v2492 = vld [vmem:[#allocation10 + $0x50] sm:$0xf]
    %v2493 = vld [vmem:[#allocation10 + $0x54] sm:$0xf]
    %v2494 = vld [vmem:[#allocation10 + $0x58] sm:$0xf]
    %v2495 = vld [vmem:[#allocation10 + $0x5c] sm:$0xf]
    %v2496 = vld [vmem:[#allocation10 + $0x60] sm:$0xf]
    %v2497 = vld [vmem:[#allocation10 + $0x64] sm:$0xf]
    %v2498 = vld [vmem:[#allocation10 + $0x68] sm:$0xf]
    %v2499 = vld [vmem:[#allocation10 + $0x6c] sm:$0xf]
    %v2500 = vld [vmem:[#allocation10 + $0x70] sm:$0xf]
    %v2501 = vld [vmem:[#allocation10 + $0x74] sm:$0xf]
    %v2502 = vld [vmem:[#allocation10 + $0x78] sm:$0xf]
    %v2503 = vld [vmem:[#allocation10 + $0x7c] sm:$0xf]
    %v2504 = vld [vmem:[#allocation10 + $0x80] sm:$0xf]
    %v2505 = vld [vmem:[#allocation10 + $0x84] sm:$0xf]
    %v2506 = vld [vmem:[#allocation10 + $0x88] sm:$0xf]
    %v2507 = vld [vmem:[#allocation10 + $0x8c] sm:$0xf]
    %v2508 = vld [vmem:[#allocation10 + $0x90] sm:$0xf]
    %v2509 = vld [vmem:[#allocation10 + $0x94] sm:$0xf]
    %v2510 = vld [vmem:[#allocation10 + $0x98] sm:$0xf]
    %v2511 = vld [vmem:[#allocation10 + $0x9c] sm:$0xf]
    %v2512 = vld [vmem:[#allocation10 + $0xa0] sm:$0xf]
    %v2513 = vld [vmem:[#allocation10 + $0xa4] sm:$0xf]
    %v2514 = vld [vmem:[#allocation10 + $0xa8] sm:$0xf]
    %v2515 = vld [vmem:[#allocation10 + $0xac] sm:$0xf]
    %v2516 = vld [vmem:[#allocation10 + $0xb0] sm:$0xf]
    %v2517 = vld [vmem:[#allocation10 + $0xb4] sm:$0xf]
    %v2518 = vld [vmem:[#allocation10 + $0xb8] sm:$0xf]
    %v2519 = vld [vmem:[#allocation10 + $0xbc] sm:$0xf]
    %v2520 = vld [vmem:[#allocation10 + $0xc0] sm:$0xf]
    %v2521 = vld [vmem:[#allocation10 + $0xc4] sm:$0xf]
    %v2522 = vld [vmem:[#allocation10 + $0xc8] sm:$0xf]
    %v2523 = vld [vmem:[#allocation10 + $0xcc] sm:$0xf]
    %v2524 = vld [vmem:[#allocation10 + $0xd0] sm:$0xf]
    %v2525 = vld [vmem:[#allocation10 + $0xd4] sm:$0xf]
    %v2526 = vld [vmem:[#allocation10 + $0xd8] sm:$0xf]
    %v2527 = vld [vmem:[#allocation10 + $0xdc] sm:$0xf]
    %v2528 = vld [vmem:[#allocation10 + $0xe0] sm:$0xf]
    %v2529 = vld [vmem:[#allocation10 + $0xe4] sm:$0xf]
    %v2530 = vld [vmem:[#allocation10 + $0xe8] sm:$0xf]
    %v2531 = vld [vmem:[#allocation10 + $0xec] sm:$0xf]
    %v2532 = vld [vmem:[#allocation10 + $0xf0] sm:$0xf]
    %v2533 = vld [vmem:[#allocation10 + $0xf4] sm:$0xf]
    %v2534 = vld [vmem:[#allocation10 + $0xf8] sm:$0xf]
    %v2535 = vld [vmem:[#allocation10 + $0xfc] sm:$0xf]
    %v2536 = vld [vmem:[%s8] sm:$0x1]
    %v2538 = vlaneseq
    %v2539 = vshrl.u32 %v2538, 7
    %v2540 = vsub.s32 0, %v2539
    %v2541 = vrot.slane %v2536, %v2540
    %v2607 = vunpack.c.l.b16 %v2472
    %v2608 = vunpack.c.l.b16 %v2473
    %v2609 = vunpack.c.l.b16 %v2474
    %v2610 = vunpack.c.l.b16 %v2475
    %v2611 = vunpack.c.l.b16 %v2476
    %v2612 = vunpack.c.l.b16 %v2477
    %v2613 = vunpack.c.l.b16 %v2478
    %v2614 = vunpack.c.l.b16 %v2479
    %v2615 = vunpack.c.l.b16 %v2480
    %v2616 = vunpack.c.l.b16 %v2481
    %v2617 = vunpack.c.l.b16 %v2482
    %v2618 = vunpack.c.l.b16 %v2483
    %v2619 = vunpack.c.l.b16 %v2484
    %v2620 = vunpack.c.l.b16 %v2485
    %v2621 = vunpack.c.l.b16 %v2486
    %v2622 = vunpack.c.l.b16 %v2487
    %v2623 = vunpack.c.l.b16 %v2488
    %v2624 = vunpack.c.l.b16 %v2489
    %v2625 = vunpack.c.l.b16 %v2490
    %v2626 = vunpack.c.l.b16 %v2491
    %v2627 = vunpack.c.l.b16 %v2492
    %v2628 = vunpack.c.l.b16 %v2493
    %v2629 = vunpack.c.l.b16 %v2494
    %v2630 = vunpack.c.l.b16 %v2495
    %v2631 = vunpack.c.l.b16 %v2496
    %v2632 = vunpack.c.l.b16 %v2497
    %v2633 = vunpack.c.l.b16 %v2498
    %v2634 = vunpack.c.l.b16 %v2499
    %v2635 = vunpack.c.l.b16 %v2500
    %v2636 = vunpack.c.l.b16 %v2501
    %v2637 = vunpack.c.l.b16 %v2502
    %v2638 = vunpack.c.l.b16 %v2503
    %v2639 = vunpack.c.l.b16 %v2504
    %v2640 = vunpack.c.l.b16 %v2505
    %v2641 = vunpack.c.l.b16 %v2506
    %v2642 = vunpack.c.l.b16 %v2507
    %v2643 = vunpack.c.l.b16 %v2508
    %v2644 = vunpack.c.l.b16 %v2509
    %v2645 = vunpack.c.l.b16 %v2510
    %v2646 = vunpack.c.l.b16 %v2511
    %v2647 = vunpack.c.l.b16 %v2512
    %v2648 = vunpack.c.l.b16 %v2513
    %v2649 = vunpack.c.l.b16 %v2514
    %v2650 = vunpack.c.l.b16 %v2515
    %v2651 = vunpack.c.l.b16 %v2516
    %v2652 = vunpack.c.l.b16 %v2517
    %v2653 = vunpack.c.l.b16 %v2518
    %v2654 = vunpack.c.l.b16 %v2519
    %v2655 = vunpack.c.l.b16 %v2520
    %v2656 = vunpack.c.l.b16 %v2521
    %v2657 = vunpack.c.l.b16 %v2522
    %v2658 = vunpack.c.l.b16 %v2523
    %v2659 = vunpack.c.l.b16 %v2524
    %v2660 = vunpack.c.l.b16 %v2525
    %v2661 = vunpack.c.l.b16 %v2526
    %v2662 = vunpack.c.l.b16 %v2527
    %v2663 = vunpack.c.l.b16 %v2528
    %v2664 = vunpack.c.l.b16 %v2529
    %v2665 = vunpack.c.l.b16 %v2530
    %v2666 = vunpack.c.l.b16 %v2531
    %v2667 = vunpack.c.l.b16 %v2532
    %v2668 = vunpack.c.l.b16 %v2533
    %v2669 = vunpack.c.l.b16 %v2534
    %v2670 = vunpack.c.l.b16 %v2535
    %v2671 = vpack.c.b16 %v2608, %v2607
    %v2672 = vpack.c.b16 %v2610, %v2609
    %v2673 = vpack.c.b16 %v2612, %v2611
    %v2674 = vpack.c.b16 %v2614, %v2613
    %v2675 = vpack.c.b16 %v2616, %v2615
    %v2676 = vpack.c.b16 %v2618, %v2617
    %v2677 = vpack.c.b16 %v2620, %v2619
    %v2678 = vpack.c.b16 %v2622, %v2621
    %v2679 = vpack.c.b16 %v2624, %v2623
    %v2680 = vpack.c.b16 %v2626, %v2625
    %v2681 = vpack.c.b16 %v2628, %v2627
    %v2682 = vpack.c.b16 %v2630, %v2629
    %v2683 = vpack.c.b16 %v2632, %v2631
    %v2684 = vpack.c.b16 %v2634, %v2633
    %v2685 = vpack.c.b16 %v2636, %v2635
    %v2686 = vpack.c.b16 %v2638, %v2637
    %v2687 = vpack.c.b16 %v2640, %v2639
    %v2688 = vpack.c.b16 %v2642, %v2641
    %v2689 = vpack.c.b16 %v2644, %v2643
    %v2690 = vpack.c.b16 %v2646, %v2645
    %v2691 = vpack.c.b16 %v2648, %v2647
    %v2692 = vpack.c.b16 %v2650, %v2649
    %v2693 = vpack.c.b16 %v2652, %v2651
    %v2694 = vpack.c.b16 %v2654, %v2653
    %v2695 = vpack.c.b16 %v2656, %v2655
    %v2696 = vpack.c.b16 %v2658, %v2657
    %v2697 = vpack.c.b16 %v2660, %v2659
    %v2698 = vpack.c.b16 %v2662, %v2661
    %v2699 = vpack.c.b16 %v2664, %v2663
    %v2700 = vpack.c.b16 %v2666, %v2665
    %v2701 = vpack.c.b16 %v2668, %v2667
    %v2702 = vpack.c.b16 %v2670, %v2669
    %2735 = vmatprep.subr.bf16.mxu0 0
    %2736 = vmatpush1.bf16.msra.mxu0 %v2671
    %2737 = vmatprep.subr.bf16.mxu0 0
    %2738 = vmatpush1.bf16.msra.mxu0 %v2672
    %2739 = vmatprep.subr.bf16.mxu0 0
    %2740 = vmatpush1.bf16.msra.mxu0 %v2673
    %2741 = vmatprep.subr.bf16.mxu0 0
    %2742 = vmatpush1.bf16.msra.mxu0 %v2674
    %2743 = vmatprep.subr.bf16.mxu0 0
    %2744 = vmatpush1.bf16.msra.mxu0 %v2675
    %2745 = vmatprep.subr.bf16.mxu0 0
    %2746 = vmatpush1.bf16.msra.mxu0 %v2676
    %2747 = vmatprep.subr.bf16.mxu0 0
    %2748 = vmatpush1.bf16.msra.mxu0 %v2677
    %2749 = vmatprep.subr.bf16.mxu0 0
    %2750 = vmatpush1.bf16.msra.mxu0 %v2678
    %2751 = vmatprep.subr.bf16.mxu0 0
    %2752 = vmatpush1.bf16.msra.mxu0 %v2679
    %2753 = vmatprep.subr.bf16.mxu0 0
    %2754 = vmatpush1.bf16.msra.mxu0 %v2680
    %2755 = vmatprep.subr.bf16.mxu0 0
    %2756 = vmatpush1.bf16.msra.mxu0 %v2681
    %2757 = vmatprep.subr.bf16.mxu0 0
    %2758 = vmatpush1.bf16.msra.mxu0 %v2682
    %2759 = vmatprep.subr.bf16.mxu0 0
    %2760 = vmatpush1.bf16.msra.mxu0 %v2683
    %2761 = vmatprep.subr.bf16.mxu0 0
    %2762 = vmatpush1.bf16.msra.mxu0 %v2684
    %2763 = vmatprep.subr.bf16.mxu0 0
    %2764 = vmatpush1.bf16.msra.mxu0 %v2685
    %2765 = vmatprep.subr.bf16.mxu0 0
    %2766 = vmatpush1.bf16.msra.mxu0 %v2686
    %2767 = vmatprep.mubr.bf16.mxu0 %v2469
    %2768 = vmatmul.mubr.bf16.gmra.mrb[0].mxu0 %v2468
    %v2769 = vpop.f32.mrb[0].mxu0
    %v2770 = vadd.f32 %v2541, %v2769
    %v2771 = vpop.f32.mrb[0].mxu0
    %v2772 = vpop.f32.mrb[0].mxu0
    %v2773 = vpop.f32.mrb[0].mxu0
    %2774 = vdwg.mxu0
    %2775 = vmatprep.subr.bf16.mxu0 0
    %2776 = vmatpush1.bf16.msra.mxu0 %v2687
    %2777 = vmatprep.subr.bf16.mxu0 0
    %2778 = vmatpush1.bf16.msra.mxu0 %v2688
    %2779 = vmatprep.subr.bf16.mxu0 0
    %2780 = vmatpush1.bf16.msra.mxu0 %v2689
    %2781 = vmatprep.subr.bf16.mxu0 0
    %2782 = vmatpush1.bf16.msra.mxu0 %v2690
    %2783 = vmatprep.subr.bf16.mxu0 0
    %2784 = vmatpush1.bf16.msra.mxu0 %v2691
    %2785 = vmatprep.subr.bf16.mxu0 0
    %2786 = vmatpush1.bf16.msra.mxu0 %v2692
    %2787 = vmatprep.subr.bf16.mxu0 0
    %2788 = vmatpush1.bf16.msra.mxu0 %v2693
    %2789 = vmatprep.subr.bf16.mxu0 0
    %2790 = vmatpush1.bf16.msra.mxu0 %v2694
    %2791 = vmatprep.subr.bf16.mxu0 0
    %2792 = vmatpush1.bf16.msra.mxu0 %v2695
    %2793 = vmatprep.subr.bf16.mxu0 0
    %2794 = vmatpush1.bf16.msra.mxu0 %v2696
    %2795 = vmatprep.subr.bf16.mxu0 0
    %2796 = vmatpush1.bf16.msra.mxu0 %v2697
    %2797 = vmatprep.subr.bf16.mxu0 0
    %2798 = vmatpush1.bf16.msra.mxu0 %v2698
    %2799 = vmatprep.subr.bf16.mxu0 0
    %2800 = vmatpush1.bf16.msra.mxu0 %v2699
    %2801 = vmatprep.subr.bf16.mxu0 0
    %2802 = vmatpush1.bf16.msra.mxu0 %v2700
    %2803 = vmatprep.subr.bf16.mxu0 0
    %2804 = vmatpush1.bf16.msra.mxu0 %v2701
    %2805 = vmatprep.subr.bf16.mxu0 0
    %2806 = vmatpush1.bf16.msra.mxu0 %v2702
    %2807 = vmatprep.mubr.bf16.mxu0 %v2471
    %2808 = vmatmul.mubr.bf16.gmra.mrb[0].mxu0 %v2470
    %v2809 = vpop.f32.mrb[0].mxu0
    %v2810 = vadd.f32 %v2770, %v2809
    %v2811 = vpop.f32.mrb[0].mxu0
    %v2812 = vpop.f32.mrb[0].mxu0
    %v2813 = vpop.f32.mrb[0].mxu0
    %2814 = vdwg.mxu0
    %2815 = vst [vmem:[#allocation11] sm:$0xff] %v2810
    // Predicated region
    $region58: #{tpu_custom_call.1} parent=1 // pred_check
      _
    $region59: #{tpu_custom_call.1} parent=1 // pred_check_branch
      %2817 = sbr.rel (0) target = $region61
    $region60: #{tpu_custom_call.1} parent=1 // pred_region
      %s2819 = ssub.s32 128, 128
      %2820 = vsyncadd [#allocation4], %s2819
      %s2822 = sshll.u32 [#allocation11], 4
      %s2823 = int_to_ptr.vmem [resolvable:$true] %s2822
      %2825 = dma.vmem_to_hbm [thread:$0]  %s2823, 128, %s9, [#allocation4]
    $region61: #{tpu_custom_call.1} parent=1 // pred_fallthru
      _
    // Predicated region
    $region62: #{tpu_custom_call.1} parent=1 // pred_check
      _
    $region63: #{tpu_custom_call.1} parent=1 // pred_check_branch
      %2827 = sbr.rel (0) target = $region65
    $region64: #{tpu_custom_call.1} parent=1 // pred_region
      %s2829 = ssub.s32 32, 32
      %2830 = vsyncadd [#allocation13], %s2829
      %s2832 = sshll.u32 [#allocation12], 4
      %s2833 = int_to_ptr.vmem [resolvable:$true] %s2832
      %2835 = dma.vmem_to_hbm [thread:$0]  %s2833, 32, %s10, [#allocation13]
    $region65: #{tpu_custom_call.1} parent=1 // pred_fallthru
      _
    // Predicated region
    $region66: #{tpu_custom_call.1} parent=1 // pred_check
      _
    $region67: #{tpu_custom_call.1} parent=1 // pred_check_branch
      %2837 = sbr.rel (0) target = $region69
    $region68: #{tpu_custom_call.1} parent=1 // pred_region
      %2838 = dma.done [#allocation4], 128
    $region69: #{tpu_custom_call.1} parent=1 // pred_fallthru
      _
    // Predicated region
    $region70: #{tpu_custom_call.1} parent=1 // pred_check
      _
    $region71: #{tpu_custom_call.1} parent=1 // pred_check_branch
      %2840 = sbr.rel (0) target = $region73
    $region72: #{tpu_custom_call.1} parent=1 // pred_region
      %2841 = dma.done [#allocation13], 32
    $region73: #{tpu_custom_call.1} parent=1 // pred_fallthru
      _
    %2842 = vsyncpa [#allocation3], 1
    %2843 = vsyncpa [#allocation6], 1
    %2844 = vsyncpa [#allocation9], 1
    %2845 = vsyncpa [#allocation4], 1
    %2846 = vsyncpa [#allocation13], 1

</llo_original>
